<compile_context>
chip_gen: v7x
topology: tpu7x:2x2x1
jax: 0.10.0
libtpu: 0.0.40
codegen_flags: <defaults>
</compile_context>

<pallas_src>
from itertools import product

import numpy as np
import jax
import jax.numpy as jnp
from jax import lax
from jax.experimental import pallas as pl
from jax.experimental.pallas import tpu as pltpu


# ----------------------------------------------------------------------------
# Shared layout bookkeeping for the packed f32 constants buffer
# ----------------------------------------------------------------------------
def _const_offsets(batch_size, rows_per_b):
    br = batch_size * rows_per_b
    ceil8 = lambda n: ((n + 7) // 8) * 8
    off_eye = 128                       # rows [0,128)      : pcs (signed column permutation)
    off_b3 = off_eye + ceil8(br)        # rows [128,128+br) : scrambled identity I_N
    off_b4 = off_b3 + 8                 # one row           : tiled deconv3 bias
    n_rows = off_b4 + 8                 # one row           : tiled deconv4 bias (lanes 0:32)
    return off_eye, off_b3, off_b4, n_rows


# ----------------------------------------------------------------------------
# Fused Pallas kernel: deconv2 -> anti -> deconv3 -> anti -> deconv4 ->
#                      hermitian symmetrize -> per-batch L2 normalize -> + I_N
# ----------------------------------------------------------------------------
def _make_decoder_kernel(batch_size, hin, win):
    rpb = hin * win
    off_eye, off_b3, off_b4, _ = _const_offsets(batch_size, rpb)
    # global source row of the spatial (i <-> j) transpose, for each output row (b, i, j)
    row_src = [b * rpb + (j * win + i)
               for b in range(batch_size) for i in range(hin) for j in range(win)]

    def kernel(m1_ref, w2_ref, w3_ref, w4_ref, c_ref, o_ref):
        f32, bf16 = jnp.float32, jnp.bfloat16

        # ---- deconv2 (bias folded into m1's ones-column) : (br, cin_pad) x (cin_pad, 512)
        z2 = jnp.dot(m1_ref[...], w2_ref[...], preferred_element_type=f32)     # (br, 512) f32

        w3p, w3n = w3_ref[0:128, :], w3_ref[128:256, :]                         # (128,128) bf16
        w4p, w4n = w4_ref[0:128, :], w4_ref[128:256, :]                         # (128, 32) bf16
        b3row = c_ref[off_b3:off_b3 + 1, :]                                     # (1, 128) f32
        b4row = c_ref[off_b4:off_b4 + 1, 0:32]                                  # (1, 32)  f32

        # ---- per deconv2-offset group: AntiRectifier -> deconv3 -> AntiRectifier -> deconv4
        z4_parts = []
        for g in range(4):                                # g = (dy1, dx1)
            z2g = z2[:, g * 128:(g + 1) * 128]
            a2p = jnp.maximum(z2g, 0.0).astype(bf16)
            a2n = jnp.maximum(-z2g, 0.0).astype(bf16)
            z3g = (jnp.dot(a2p, w3p, preferred_element_type=f32)
                   + jnp.dot(a2n, w3n, preferred_element_type=f32) + b3row)      # (br, 128)
            # TODO(synk): Dropout(p=0.3) is identity here (eval mode); training mask not implemented.
            a3p = jnp.maximum(z3g, 0.0).astype(bf16)
            a3n = jnp.maximum(-z3g, 0.0).astype(bf16)
            z4_parts.append(jnp.dot(a3p, w4p, preferred_element_type=f32)
                            + jnp.dot(a3n, w4n, preferred_element_type=f32) + b4row)  # (br, 32)
        z4 = jnp.concatenate(z4_parts, axis=-1)                                  # (br, 128) f32

        # ---- Hermitian part (Kx + conj(Kx^T)) / 2 in the scrambled layout:
        #      rows: static (i <-> j) gather; columns: signed permutation matmul (pcs, f32)
        zrow = jnp.concatenate([z4[s:s + 1, :] for s in row_src], axis=0)        # (br, 128)
        zt = jnp.dot(zrow, c_ref[0:128, :], preferred_element_type=f32)
        sh = 0.5 * (z4 + zt)

        # ---- per-batch Frobenius normalization (reduction, no indicator matmul) + I_N
        out_parts = []
        for b in range(batch_size):
            s_b = sh[b * rpb:(b + 1) * rpb, :]
            ssq = jnp.sum(jnp.sum(s_b * s_b, axis=1, keepdims=True),
                          axis=0, keepdims=True)                                 # (1, 1)
            scale = lax.rsqrt(jnp.maximum(ssq, 1e-24))
            eye_b = c_ref[off_eye + b * rpb:off_eye + (b + 1) * rpb, :]
            out_parts.append(s_b * scale + eye_b)
        o_ref[...] = jnp.concatenate(out_parts, axis=0)

    return kernel


# ----------------------------------------------------------------------------
# One-time weight / layout preprocessing (outside the forward / jit)
# ----------------------------------------------------------------------------
def prepare_params(params, batch_size, hin, win):
    assert hin == win, "square spatial input required"
    w2 = np.asarray(params['deconv2_w'], np.float32)
    b2 = np.asarray(params['deconv2_b'], np.float32)
    w3 = np.asarray(params['deconv3_w'], np.float32)
    b3 = np.asarray(params['deconv3_b'], np.float32)
    w4 = np.asarray(params['deconv4_w'], np.float32)
    b4 = np.asarray(params['deconv4_b'], np.float32)
    cin = w2.shape[0]
    assert w2.shape[1:] == (128, 2, 2) and w3.shape == (256, 32, 2, 2) and w4.shape == (64, 2, 2, 2)

    # deconv2: (Cin,128,2,2) -> (cin_pad, 512); bias folded into the row hit by m1's ones-column
    cin_pad = ((cin + 1 + 127) // 128) * 128
    w2m = np.zeros((cin_pad, 512), np.float32)
    w2m[:cin] = np.transpose(w2, (0, 2, 3, 1)).reshape(cin, 512)       # cols = (dy1, dx1, co)
    w2m[cin] = np.tile(b2, 4)

    # deconv3: AntiRectifier split (pos/neg halves), shared across the 4 deconv2 offset groups
    w3p = np.transpose(w3[:128], (0, 2, 3, 1)).reshape(128, 128)       # cols = (dy2, dx2, co3)
    w3n = np.transpose(w3[128:], (0, 2, 3, 1)).reshape(128, 128)
    w3m = np.concatenate([w3p, w3n], axis=0)                           # (256, 128)

    # deconv4: split halves, block-diagonal over the 4 deconv3 offset groups
    w4p = np.transpose(w4[:32], (0, 2, 3, 1)).reshape(32, 8)           # cols = (dy3, dx3, c)
    w4n = np.transpose(w4[32:], (0, 2, 3, 1)).reshape(32, 8)

    def blkdiag(blk):
        out = np.zeros((128, 32), np.float32)
        for g in range(4):
            out[g * 32:(g + 1) * 32, g * 8:(g + 1) * 8] = blk
        return out

    w4m = np.concatenate([blkdiag(w4p), blkdiag(w4n)], axis=0)         # (256, 32)

    # packed f32 constants: pcs | scrambled eye | tiled b3 | tiled b4
    rpb = hin * win
    off_eye, off_b3, off_b4, n_rows = _const_offsets(batch_size, rpb)
    consts = np.zeros((n_rows, 128), np.float32)
    # signed column permutation for conj-transpose: swap y-bits <-> x-bits, negate imag
    for y2, x2, y1, x1, y0, x0, c in product(range(2), repeat=7):
        k = (((y2 * 2 + x2) * 2 + y1) * 2 + x1) * 8 + (y0 * 2 + x0) * 2 + c
        ks = (((x2 * 2 + y2) * 2 + x1) * 2 + y1) * 8 + (x0 * 2 + y0) * 2 + c
        consts[ks, k] = 1.0 if c == 0 else -1.0
    # scrambled identity I_N (real part only)
    for b in range(batch_size):
        for i in range(hin):
            r = off_eye + b * rpb + i * win + i
            for y2, y1, y0 in product(range(2), repeat=3):
                k = (((y2 * 2 + y2) * 2 + y1) * 2 + y1) * 8 + (y0 * 2 + y0) * 2
                consts[r, k] = 1.0
    consts[off_b3, :] = np.tile(b3, 4)
    consts[off_b4, 0:32] = np.tile(b4, 16)

    return dict(w2m=jnp.asarray(w2m, jnp.bfloat16),
                w3m=jnp.asarray(w3m, jnp.bfloat16),
                w4m=jnp.asarray(w4m, jnp.bfloat16),
                consts=jnp.asarray(consts),
                cin=cin, cin_pad=cin_pad)


# ----------------------------------------------------------------------------
# Forward
# ----------------------------------------------------------------------------
def decoder_forward(x, x_skip, prepped, batch_size, N):
    """x: (B, Cin, Hin, Win) float32 NCHW.  x_skip is unused by the reference forward."""
    del x_skip  # the PyTorch Decoder.forward never uses it
    B, Cin, Hin, Win = x.shape
    assert B == batch_size and Hin == Win and N == 8 * Hin
    assert Cin == prepped['cin']
    rpb = Hin * Win
    br = B * rpb
    cin_pad = prepped['cin_pad']

    # pixels on rows, channels on lanes; ones-column at index Cin carries the deconv2 bias
    m1 = jnp.transpose(x, (0, 2, 3, 1)).reshape(br, Cin)
    m1 = jnp.concatenate(
        [m1, jnp.ones((br, 1), m1.dtype), jnp.zeros((br, cin_pad - Cin - 1), m1.dtype)],
        axis=1).astype(jnp.bfloat16)

    kernel = _make_decoder_kernel(B, Hin, Win)
    vmem = pl.BlockSpec(memory_space=pltpu.MemorySpace.VMEM)
    out = pl.pallas_call(
        kernel,
        out_shape=jax.ShapeDtypeStruct((br, 128), jnp.float32),
        in_specs=[vmem, vmem, vmem, vmem, vmem],
        out_specs=vmem,
    )(m1, prepped['w2m'], prepped['w3m'], prepped['w4m'], prepped['consts'])

    # Un-scramble (B*Hin*Win, 128) -> (B, 2, N, N); columns are (y2,x2,y1,x1,y0,x0,c).
    img = out.reshape(B, Hin, Win, 2, 2, 2, 2, 2, 2, 2)
    img = jnp.transpose(img, (0, 9, 1, 3, 5, 7, 2, 4, 6, 8)).reshape(B, 2, N, N)
    # TODO(synk): PyTorch returns complex128; TPU has no float64, so complex64 is used.
    return (img[:, 0] + 1j * img[:, 1]).astype(jnp.complex64)


# ----------------------------------------------------------------------------
# Pure-JAX reference (for numerical verification only)
# ----------------------------------------------------------------------------
def _deconv2x2_s2_ref(x, w, b):
    Bn, Cin, H, W = x.shape
    Cout = w.shape[1]
    t = jnp.einsum('bchw,cokl->bohkwl', x, w, precision='highest')
    t = t.reshape(Bn, Cout, 2 * H, 2 * W)
    return t + b[None, :, None, None]


def decoder_forward_ref(x, params, N):
    h = _deconv2x2_s2_ref(x, params['deconv2_w'], params['deconv2_b'])
    h = jnp.concatenate([jnp.maximum(h, 0.0), jnp.maximum(-h, 0.0)], axis=1)
    h = _deconv2x2_s2_ref(h, params['deconv3_w'], params['deconv3_b'])
    h = jnp.concatenate([jnp.maximum(h, 0.0), jnp.maximum(-h, 0.0)], axis=1)
    h = _deconv2x2_s2_ref(h, params['deconv4_w'], params['deconv4_b'])
    r, i = h[:, 0], h[:, 1]
    rz_r = 0.5 * (r + jnp.swapaxes(r, 1, 2))
    rz_i = 0.5 * (i - jnp.swapaxes(i, 1, 2))
    nrm = jnp.sqrt(jnp.sum(rz_r * rz_r + rz_i * rz_i, axis=(1, 2), keepdims=True))
    scale = 1.0 / jnp.maximum(nrm, 1e-12)
    rz_r = rz_r * scale + jnp.eye(N, dtype=rz_r.dtype)[None]
    rz_i = rz_i * scale
    return rz_r + 1j * rz_i


if __name__ == "__main__":
    key = jax.random.PRNGKey(0)
    k_x, k_skip, kw0, kw1, kw2, kw3, kw4, kw5 = jax.random.split(key, 8)

    B = 2
    Cin = 480
    Hin = Win = 2
    N = 8 * Hin  # 16

    def uinit(k, shape, fan_in):
        bound = 1.0 / np.sqrt(fan_in)
        return jax.random.uniform(k, shape, jnp.float32, -bound, bound)

    params = {
        'deconv2_w': uinit(kw0, (Cin, 128, 2, 2), Cin * 4),
        'deconv2_b': uinit(kw1, (128,), Cin * 4),
        'deconv3_w': uinit(kw2, (256, 32, 2, 2), 256 * 4),
        'deconv3_b': uinit(kw3, (32,), 256 * 4),
        'deconv4_w': uinit(kw4, (64, 2, 2, 2), 64 * 4),
        'deconv4_b': uinit(kw5, (2,), 64 * 4),
    }

    x = jax.random.normal(k_x, (B, Cin, Hin, Win), jnp.float32)
    x_skip = jax.random.normal(k_skip, (B, 256, 4, 4), jnp.float32)  # unused by the forward

    # one-time weight / layout preprocessing (outside the forward / jit)
    prepped = prepare_params(params, B, Hin, Win)

    fwd = jax.jit(lambda xx, xs: decoder_forward(xx, xs, prepped, B, N))
    rz = fwd(x, x_skip)
    jax.block_until_ready(rz)

    assert rz.shape == (B, N, N) and rz.dtype == jnp.complex64, (rz.shape, rz.dtype)
    assert bool(jnp.all(jnp.isfinite(jnp.real(rz)))), "non-finite real part"
    assert bool(jnp.all(jnp.isfinite(jnp.imag(rz)))), "non-finite imag part"

    rz_ref = decoder_forward_ref(x, params, N)
    err = float(jnp.max(jnp.abs(rz - rz_ref)))
    assert err < 2e-2, f"mismatch vs pure-JAX reference: max abs err = {err}"

    print("KERNEL_OK")
</pallas_src>

<mosaic_0001>
module attributes {stable_mosaic.version = 11 : i64} {
  func.func @kernel(%arg0: memref<8x512xbf16, #tpu.memory_space<vmem>>, %arg1: memref<512x512xbf16, #tpu.memory_space<vmem>>, %arg2: memref<256x128xbf16, #tpu.memory_space<vmem>>, %arg3: memref<256x32xbf16, #tpu.memory_space<vmem>>, %arg4: memref<152x128xf32, #tpu.memory_space<vmem>>, %arg5: memref<8x128xf32, #tpu.memory_space<vmem>>) attributes {dimension_semantics = [], scalar_prefetch = 0 : i64, scratch_operands = 0 : i64, tpu.core_type = #tpu.core_type<tc>} {
    %c0 = arith.constant 0 : index
    %c0_0 = arith.constant 0 : index
    %0 = vector.load %arg0[%c0, %c0_0] : memref<8x512xbf16, #tpu.memory_space<vmem>>, vector<8x512xbf16>
    %c0_1 = arith.constant 0 : index
    %c0_2 = arith.constant 0 : index
    %1 = vector.load %arg1[%c0_1, %c0_2] : memref<512x512xbf16, #tpu.memory_space<vmem>>, vector<512x512xbf16>
    %cst = arith.constant dense<0.000000e+00> : vector<8x512xf32>
    %2 = tpu.matmul %0, %1, %cst {dimension_numbers = #tpu.dot_dimension_numbers<[1], [0], [0], [1], [0, 0, 1, 1], [], []>} : vector<8x512xbf16>, vector<512x512xbf16>, vector<8x512xf32> -> vector<8x512xf32>
    %c0_3 = arith.constant 0 : index
    %c0_4 = arith.constant 0 : index
    %3 = vector.load %arg2[%c0_3, %c0_4] : memref<256x128xbf16, #tpu.memory_space<vmem>>, vector<128x128xbf16>
    %c128 = arith.constant 128 : index
    %c0_5 = arith.constant 0 : index
    %4 = vector.load %arg2[%c128, %c0_5] : memref<256x128xbf16, #tpu.memory_space<vmem>>, vector<128x128xbf16>
    %c0_6 = arith.constant 0 : index
    %c0_7 = arith.constant 0 : index
    %5 = vector.load %arg3[%c0_6, %c0_7] : memref<256x32xbf16, #tpu.memory_space<vmem>>, vector<128x32xbf16>
    %c128_8 = arith.constant 128 : index
    %c0_9 = arith.constant 0 : index
    %6 = vector.load %arg3[%c128_8, %c0_9] : memref<256x32xbf16, #tpu.memory_space<vmem>>, vector<128x32xbf16>
    %c136 = arith.constant 136 : index
    %c0_10 = arith.constant 0 : index
    %7 = vector.load %arg4[%c136, %c0_10] : memref<152x128xf32, #tpu.memory_space<vmem>>, vector<1x128xf32>
    %c144 = arith.constant 144 : index
    %c0_11 = arith.constant 0 : index
    %8 = vector.load %arg4[%c144, %c0_11] : memref<152x128xf32, #tpu.memory_space<vmem>>, vector<1x32xf32>
    %9 = vector.extract_strided_slice %2 {offsets = [0, 0], sizes = [8, 128], strides = [1, 1]} : vector<8x512xf32> to vector<8x128xf32>
    %cst_12 = arith.constant 0.000000e+00 : f32
    %10 = vector.broadcast %cst_12 : f32 to vector<8x128xf32>
    %11 = arith.maximumf %9, %10 : vector<8x128xf32>
    %12 = arith.truncf %11 : vector<8x128xf32> to vector<8x128xbf16>
    %cst_13 = arith.constant 0.000000e+00 : f32
    %13 = vector.broadcast %cst_13 : f32 to vector<8x128xf32>
    %14 = arith.subf %13, %9 : vector<8x128xf32>
    %cst_14 = arith.constant 0.000000e+00 : f32
    %15 = vector.broadcast %cst_14 : f32 to vector<8x128xf32>
    %16 = arith.maximumf %14, %15 : vector<8x128xf32>
    %17 = arith.truncf %16 : vector<8x128xf32> to vector<8x128xbf16>
    %cst_15 = arith.constant dense<0.000000e+00> : vector<8x128xf32>
    %18 = tpu.matmul %12, %3, %cst_15 {dimension_numbers = #tpu.dot_dimension_numbers<[1], [0], [0], [1], [0, 0, 1, 1], [], []>} : vector<8x128xbf16>, vector<128x128xbf16>, vector<8x128xf32> -> vector<8x128xf32>
    %cst_16 = arith.constant dense<0.000000e+00> : vector<8x128xf32>
    %19 = tpu.matmul %17, %4, %cst_16 {dimension_numbers = #tpu.dot_dimension_numbers<[1], [0], [0], [1], [0, 0, 1, 1], [], []>} : vector<8x128xbf16>, vector<128x128xbf16>, vector<8x128xf32> -> vector<8x128xf32>
    %20 = arith.addf %18, %19 : vector<8x128xf32>
    %21 = vector.broadcast %7 : vector<1x128xf32> to vector<8x128xf32>
    %22 = arith.addf %20, %21 : vector<8x128xf32>
    %cst_17 = arith.constant 0.000000e+00 : f32
    %23 = vector.broadcast %cst_17 : f32 to vector<8x128xf32>
    %24 = arith.maximumf %22, %23 : vector<8x128xf32>
    %25 = arith.truncf %24 : vector<8x128xf32> to vector<8x128xbf16>
    %cst_18 = arith.constant 0.000000e+00 : f32
    %26 = vector.broadcast %cst_18 : f32 to vector<8x128xf32>
    %27 = arith.subf %26, %22 : vector<8x128xf32>
    %cst_19 = arith.constant 0.000000e+00 : f32
    %28 = vector.broadcast %cst_19 : f32 to vector<8x128xf32>
    %29 = arith.maximumf %27, %28 : vector<8x128xf32>
    %30 = arith.truncf %29 : vector<8x128xf32> to vector<8x128xbf16>
    %cst_20 = arith.constant dense<0.000000e+00> : vector<8x32xf32>
    %31 = tpu.matmul %25, %5, %cst_20 {dimension_numbers = #tpu.dot_dimension_numbers<[1], [0], [0], [1], [0, 0, 1, 1], [], []>} : vector<8x128xbf16>, vector<128x32xbf16>, vector<8x32xf32> -> vector<8x32xf32>
    %cst_21 = arith.constant dense<0.000000e+00> : vector<8x32xf32>
    %32 = tpu.matmul %30, %6, %cst_21 {dimension_numbers = #tpu.dot_dimension_numbers<[1], [0], [0], [1], [0, 0, 1, 1], [], []>} : vector<8x128xbf16>, vector<128x32xbf16>, vector<8x32xf32> -> vector<8x32xf32>
    %33 = arith.addf %31, %32 : vector<8x32xf32>
    %34 = vector.broadcast %8 : vector<1x32xf32> to vector<8x32xf32>
    %35 = arith.addf %33, %34 : vector<8x32xf32>
    %36 = vector.extract_strided_slice %2 {offsets = [0, 128], sizes = [8, 128], strides = [1, 1]} : vector<8x512xf32> to vector<8x128xf32>
    %cst_22 = arith.constant 0.000000e+00 : f32
    %37 = vector.broadcast %cst_22 : f32 to vector<8x128xf32>
    %38 = arith.maximumf %36, %37 : vector<8x128xf32>
    %39 = arith.truncf %38 : vector<8x128xf32> to vector<8x128xbf16>
    %cst_23 = arith.constant 0.000000e+00 : f32
    %40 = vector.broadcast %cst_23 : f32 to vector<8x128xf32>
    %41 = arith.subf %40, %36 : vector<8x128xf32>
    %cst_24 = arith.constant 0.000000e+00 : f32
    %42 = vector.broadcast %cst_24 : f32 to vector<8x128xf32>
    %43 = arith.maximumf %41, %42 : vector<8x128xf32>
    %44 = arith.truncf %43 : vector<8x128xf32> to vector<8x128xbf16>
    %cst_25 = arith.constant dense<0.000000e+00> : vector<8x128xf32>
    %45 = tpu.matmul %39, %3, %cst_25 {dimension_numbers = #tpu.dot_dimension_numbers<[1], [0], [0], [1], [0, 0, 1, 1], [], []>} : vector<8x128xbf16>, vector<128x128xbf16>, vector<8x128xf32> -> vector<8x128xf32>
    %cst_26 = arith.constant dense<0.000000e+00> : vector<8x128xf32>
    %46 = tpu.matmul %44, %4, %cst_26 {dimension_numbers = #tpu.dot_dimension_numbers<[1], [0], [0], [1], [0, 0, 1, 1], [], []>} : vector<8x128xbf16>, vector<128x128xbf16>, vector<8x128xf32> -> vector<8x128xf32>
    %47 = arith.addf %45, %46 : vector<8x128xf32>
    %48 = vector.broadcast %7 : vector<1x128xf32> to vector<8x128xf32>
    %49 = arith.addf %47, %48 : vector<8x128xf32>
    %cst_27 = arith.constant 0.000000e+00 : f32
    %50 = vector.broadcast %cst_27 : f32 to vector<8x128xf32>
    %51 = arith.maximumf %49, %50 : vector<8x128xf32>
    %52 = arith.truncf %51 : vector<8x128xf32> to vector<8x128xbf16>
    %cst_28 = arith.constant 0.000000e+00 : f32
    %53 = vector.broadcast %cst_28 : f32 to vector<8x128xf32>
    %54 = arith.subf %53, %49 : vector<8x128xf32>
    %cst_29 = arith.constant 0.000000e+00 : f32
    %55 = vector.broadcast %cst_29 : f32 to vector<8x128xf32>
    %56 = arith.maximumf %54, %55 : vector<8x128xf32>
    %57 = arith.truncf %56 : vector<8x128xf32> to vector<8x128xbf16>
    %cst_30 = arith.constant dense<0.000000e+00> : vector<8x32xf32>
    %58 = tpu.matmul %52, %5, %cst_30 {dimension_numbers = #tpu.dot_dimension_numbers<[1], [0], [0], [1], [0, 0, 1, 1], [], []>} : vector<8x128xbf16>, vector<128x32xbf16>, vector<8x32xf32> -> vector<8x32xf32>
    %cst_31 = arith.constant dense<0.000000e+00> : vector<8x32xf32>
    %59 = tpu.matmul %57, %6, %cst_31 {dimension_numbers = #tpu.dot_dimension_numbers<[1], [0], [0], [1], [0, 0, 1, 1], [], []>} : vector<8x128xbf16>, vector<128x32xbf16>, vector<8x32xf32> -> vector<8x32xf32>
    %60 = arith.addf %58, %59 : vector<8x32xf32>
    %61 = vector.broadcast %8 : vector<1x32xf32> to vector<8x32xf32>
    %62 = arith.addf %60, %61 : vector<8x32xf32>
    %63 = vector.extract_strided_slice %2 {offsets = [0, 256], sizes = [8, 128], strides = [1, 1]} : vector<8x512xf32> to vector<8x128xf32>
    %cst_32 = arith.constant 0.000000e+00 : f32
    %64 = vector.broadcast %cst_32 : f32 to vector<8x128xf32>
    %65 = arith.maximumf %63, %64 : vector<8x128xf32>
    %66 = arith.truncf %65 : vector<8x128xf32> to vector<8x128xbf16>
    %cst_33 = arith.constant 0.000000e+00 : f32
    %67 = vector.broadcast %cst_33 : f32 to vector<8x128xf32>
    %68 = arith.subf %67, %63 : vector<8x128xf32>
    %cst_34 = arith.constant 0.000000e+00 : f32
    %69 = vector.broadcast %cst_34 : f32 to vector<8x128xf32>
    %70 = arith.maximumf %68, %69 : vector<8x128xf32>
    %71 = arith.truncf %70 : vector<8x128xf32> to vector<8x128xbf16>
    %cst_35 = arith.constant dense<0.000000e+00> : vector<8x128xf32>
    %72 = tpu.matmul %66, %3, %cst_35 {dimension_numbers = #tpu.dot_dimension_numbers<[1], [0], [0], [1], [0, 0, 1, 1], [], []>} : vector<8x128xbf16>, vector<128x128xbf16>, vector<8x128xf32> -> vector<8x128xf32>
    %cst_36 = arith.constant dense<0.000000e+00> : vector<8x128xf32>
    %73 = tpu.matmul %71, %4, %cst_36 {dimension_numbers = #tpu.dot_dimension_numbers<[1], [0], [0], [1], [0, 0, 1, 1], [], []>} : vector<8x128xbf16>, vector<128x128xbf16>, vector<8x128xf32> -> vector<8x128xf32>
    %74 = arith.addf %72, %73 : vector<8x128xf32>
    %75 = vector.broadcast %7 : vector<1x128xf32> to vector<8x128xf32>
    %76 = arith.addf %74, %75 : vector<8x128xf32>
    %cst_37 = arith.constant 0.000000e+00 : f32
    %77 = vector.broadcast %cst_37 : f32 to vector<8x128xf32>
    %78 = arith.maximumf %76, %77 : vector<8x128xf32>
    %79 = arith.truncf %78 : vector<8x128xf32> to vector<8x128xbf16>
    %cst_38 = arith.constant 0.000000e+00 : f32
    %80 = vector.broadcast %cst_38 : f32 to vector<8x128xf32>
    %81 = arith.subf %80, %76 : vector<8x128xf32>
    %cst_39 = arith.constant 0.000000e+00 : f32
    %82 = vector.broadcast %cst_39 : f32 to vector<8x128xf32>
    %83 = arith.maximumf %81, %82 : vector<8x128xf32>
    %84 = arith.truncf %83 : vector<8x128xf32> to vector<8x128xbf16>
    %cst_40 = arith.constant dense<0.000000e+00> : vector<8x32xf32>
    %85 = tpu.matmul %79, %5, %cst_40 {dimension_numbers = #tpu.dot_dimension_numbers<[1], [0], [0], [1], [0, 0, 1, 1], [], []>} : vector<8x128xbf16>, vector<128x32xbf16>, vector<8x32xf32> -> vector<8x32xf32>
    %cst_41 = arith.constant dense<0.000000e+00> : vector<8x32xf32>
    %86 = tpu.matmul %84, %6, %cst_41 {dimension_numbers = #tpu.dot_dimension_numbers<[1], [0], [0], [1], [0, 0, 1, 1], [], []>} : vector<8x128xbf16>, vector<128x32xbf16>, vector<8x32xf32> -> vector<8x32xf32>
    %87 = arith.addf %85, %86 : vector<8x32xf32>
    %88 = vector.broadcast %8 : vector<1x32xf32> to vector<8x32xf32>
    %89 = arith.addf %87, %88 : vector<8x32xf32>
    %90 = vector.extract_strided_slice %2 {offsets = [0, 384], sizes = [8, 128], strides = [1, 1]} : vector<8x512xf32> to vector<8x128xf32>
    %cst_42 = arith.constant 0.000000e+00 : f32
    %91 = vector.broadcast %cst_42 : f32 to vector<8x128xf32>
    %92 = arith.maximumf %90, %91 : vector<8x128xf32>
    %93 = arith.truncf %92 : vector<8x128xf32> to vector<8x128xbf16>
    %cst_43 = arith.constant 0.000000e+00 : f32
    %94 = vector.broadcast %cst_43 : f32 to vector<8x128xf32>
    %95 = arith.subf %94, %90 : vector<8x128xf32>
    %cst_44 = arith.constant 0.000000e+00 : f32
    %96 = vector.broadcast %cst_44 : f32 to vector<8x128xf32>
    %97 = arith.maximumf %95, %96 : vector<8x128xf32>
    %98 = arith.truncf %97 : vector<8x128xf32> to vector<8x128xbf16>
    %cst_45 = arith.constant dense<0.000000e+00> : vector<8x128xf32>
    %99 = tpu.matmul %93, %3, %cst_45 {dimension_numbers = #tpu.dot_dimension_numbers<[1], [0], [0], [1], [0, 0, 1, 1], [], []>} : vector<8x128xbf16>, vector<128x128xbf16>, vector<8x128xf32> -> vector<8x128xf32>
    %cst_46 = arith.constant dense<0.000000e+00> : vector<8x128xf32>
    %100 = tpu.matmul %98, %4, %cst_46 {dimension_numbers = #tpu.dot_dimension_numbers<[1], [0], [0], [1], [0, 0, 1, 1], [], []>} : vector<8x128xbf16>, vector<128x128xbf16>, vector<8x128xf32> -> vector<8x128xf32>
    %101 = arith.addf %99, %100 : vector<8x128xf32>
    %102 = vector.broadcast %7 : vector<1x128xf32> to vector<8x128xf32>
    %103 = arith.addf %101, %102 : vector<8x128xf32>
    %cst_47 = arith.constant 0.000000e+00 : f32
    %104 = vector.broadcast %cst_47 : f32 to vector<8x128xf32>
    %105 = arith.maximumf %103, %104 : vector<8x128xf32>
    %106 = arith.truncf %105 : vector<8x128xf32> to vector<8x128xbf16>
    %cst_48 = arith.constant 0.000000e+00 : f32
    %107 = vector.broadcast %cst_48 : f32 to vector<8x128xf32>
    %108 = arith.subf %107, %103 : vector<8x128xf32>
    %cst_49 = arith.constant 0.000000e+00 : f32
    %109 = vector.broadcast %cst_49 : f32 to vector<8x128xf32>
    %110 = arith.maximumf %108, %109 : vector<8x128xf32>
    %111 = arith.truncf %110 : vector<8x128xf32> to vector<8x128xbf16>
    %cst_50 = arith.constant dense<0.000000e+00> : vector<8x32xf32>
    %112 = tpu.matmul %106, %5, %cst_50 {dimension_numbers = #tpu.dot_dimension_numbers<[1], [0], [0], [1], [0, 0, 1, 1], [], []>} : vector<8x128xbf16>, vector<128x32xbf16>, vector<8x32xf32> -> vector<8x32xf32>
    %cst_51 = arith.constant dense<0.000000e+00> : vector<8x32xf32>
    %113 = tpu.matmul %111, %6, %cst_51 {dimension_numbers = #tpu.dot_dimension_numbers<[1], [0], [0], [1], [0, 0, 1, 1], [], []>} : vector<8x128xbf16>, vector<128x32xbf16>, vector<8x32xf32> -> vector<8x32xf32>
    %114 = arith.addf %112, %113 : vector<8x32xf32>
    %115 = vector.broadcast %8 : vector<1x32xf32> to vector<8x32xf32>
    %116 = arith.addf %114, %115 : vector<8x32xf32>
    %117 = tpu.concatenate %35, %62, %89, %116 in 1 : vector<8x32xf32>, vector<8x32xf32>, vector<8x32xf32>, vector<8x32xf32> -> vector<8x128xf32>
    %118 = vector.extract_strided_slice %117 {offsets = [0, 0], sizes = [1, 128], strides = [1, 1]} : vector<8x128xf32> to vector<1x128xf32>
    %119 = vector.extract_strided_slice %117 {offsets = [2, 0], sizes = [1, 128], strides = [1, 1]} : vector<8x128xf32> to vector<1x128xf32>
    %120 = vector.extract_strided_slice %117 {offsets = [1, 0], sizes = [1, 128], strides = [1, 1]} : vector<8x128xf32> to vector<1x128xf32>
    %121 = vector.extract_strided_slice %117 {offsets = [3, 0], sizes = [1, 128], strides = [1, 1]} : vector<8x128xf32> to vector<1x128xf32>
    %122 = vector.extract_strided_slice %117 {offsets = [4, 0], sizes = [1, 128], strides = [1, 1]} : vector<8x128xf32> to vector<1x128xf32>
    %123 = vector.extract_strided_slice %117 {offsets = [6, 0], sizes = [1, 128], strides = [1, 1]} : vector<8x128xf32> to vector<1x128xf32>
    %124 = vector.extract_strided_slice %117 {offsets = [5, 0], sizes = [1, 128], strides = [1, 1]} : vector<8x128xf32> to vector<1x128xf32>
    %125 = vector.extract_strided_slice %117 {offsets = [7, 0], sizes = [1, 128], strides = [1, 1]} : vector<8x128xf32> to vector<1x128xf32>
    %126 = tpu.concatenate %118, %119, %120, %121, %122, %123, %124, %125 in 0 : vector<1x128xf32>, vector<1x128xf32>, vector<1x128xf32>, vector<1x128xf32>, vector<1x128xf32>, vector<1x128xf32>, vector<1x128xf32>, vector<1x128xf32> -> vector<8x128xf32>
    %c0_52 = arith.constant 0 : index
    %c0_53 = arith.constant 0 : index
    %127 = vector.load %arg4[%c0_52, %c0_53] : memref<152x128xf32, #tpu.memory_space<vmem>>, vector<128x128xf32>
    %cst_54 = arith.constant dense<0.000000e+00> : vector<8x128xf32>
    %128 = tpu.matmul %126, %127, %cst_54 {dimension_numbers = #tpu.dot_dimension_numbers<[1], [0], [0], [1], [0, 0, 1, 1], [], []>} : vector<8x128xf32>, vector<128x128xf32>, vector<8x128xf32> -> vector<8x128xf32>
    %129 = arith.addf %117, %128 : vector<8x128xf32>
    %cst_55 = arith.constant 5.000000e-01 : f32
    %130 = vector.broadcast %cst_55 : f32 to vector<8x128xf32>
    %131 = arith.mulf %130, %129 : vector<8x128xf32>
    %132 = vector.extract_strided_slice %131 {offsets = [0, 0], sizes = [4, 128], strides = [1, 1]} : vector<8x128xf32> to vector<4x128xf32>
    %133 = arith.mulf %132, %132 : vector<4x128xf32>
    %cst_56 = arith.constant dense<0.000000e+00> : vector<4xf32>
    %134 = vector.multi_reduction <add>, %133, %cst_56 [1] : vector<4x128xf32> to vector<4xf32>
    %135 = vector.shape_cast %134 : vector<4xf32> to vector<4x1xf32>
    %cst_57 = arith.constant dense<0.000000e+00> : vector<1xf32>
    %136 = vector.multi_reduction <add>, %135, %cst_57 [0] : vector<4x1xf32> to vector<1xf32>
    %137 = vector.shape_cast %136 : vector<1xf32> to vector<1x1xf32>
    %cst_58 = arith.constant 1.000000e-24 : f32
    %138 = vector.broadcast %cst_58 : f32 to vector<1x1xf32>
    %139 = arith.maximumf %137, %138 : vector<1x1xf32>
    %140 = math.rsqrt %139 : vector<1x1xf32>
    %c128_59 = arith.constant 128 : index
    %c0_60 = arith.constant 0 : index
    %141 = vector.load %arg4[%c128_59, %c0_60] : memref<152x128xf32, #tpu.memory_space<vmem>>, vector<4x128xf32>
    %142 = vector.broadcast %140 : vector<1x1xf32> to vector<4x128xf32>
    %143 = arith.mulf %132, %142 : vector<4x128xf32>
    %144 = arith.addf %143, %141 : vector<4x128xf32>
    %145 = vector.extract_strided_slice %131 {offsets = [4, 0], sizes = [4, 128], strides = [1, 1]} : vector<8x128xf32> to vector<4x128xf32>
    %146 = arith.mulf %145, %145 : vector<4x128xf32>
    %cst_61 = arith.constant dense<0.000000e+00> : vector<4xf32>
    %147 = vector.multi_reduction <add>, %146, %cst_61 [1] : vector<4x128xf32> to vector<4xf32>
    %148 = vector.shape_cast %147 : vector<4xf32> to vector<4x1xf32>
    %cst_62 = arith.constant dense<0.000000e+00> : vector<1xf32>
    %149 = vector.multi_reduction <add>, %148, %cst_62 [0] : vector<4x1xf32> to vector<1xf32>
    %150 = vector.shape_cast %149 : vector<1xf32> to vector<1x1xf32>
    %cst_63 = arith.constant 1.000000e-24 : f32
    %151 = vector.broadcast %cst_63 : f32 to vector<1x1xf32>
    %152 = arith.maximumf %150, %151 : vector<1x1xf32>
    %153 = math.rsqrt %152 : vector<1x1xf32>
    %c132 = arith.constant 132 : index
    %c0_64 = arith.constant 0 : index
    %154 = vector.load %arg4[%c132, %c0_64] : memref<152x128xf32, #tpu.memory_space<vmem>>, vector<4x128xf32>
    %155 = vector.broadcast %153 : vector<1x1xf32> to vector<4x128xf32>
    %156 = arith.mulf %145, %155 : vector<4x128xf32>
    %157 = arith.addf %156, %154 : vector<4x128xf32>
    %158 = tpu.concatenate %144, %157 in 0 : vector<4x128xf32>, vector<4x128xf32> -> vector<8x128xf32>
    %c0_65 = arith.constant 0 : index
    %c0_66 = arith.constant 0 : index
    %159 = vector.load %arg5[%c0_65, %c0_66] : memref<8x128xf32, #tpu.memory_space<vmem>>, vector<8x128xf32>
    tpu.vector_store %arg5[%c0_65, %c0_66], %158 {strides = array<i32>} : memref<8x128xf32, #tpu.memory_space<vmem>>, vector<8x128xf32>,
    return
  }
}

</mosaic_0001>

<llo_original>
// kernel: custom-call
$region0: #{custom-call}
  %s0 = inlined_call_operand.vmem [shape: f32[2,16,16], index: 0, kind: input, shape index: {}]
  %s1 = inlined_call_operand.vmem [shape: f32[2,16,16], index: 1, kind: input, shape index: {}]
  %s2 = inlined_call_operand.hbm [shape: c64[2,16,16], index: 2, kind: output, shape index: {}]
  %s3 = scalar_lea.hbm %s2, 512
  $region1: #{custom-call} parent=0
    #allocation0 [shape = 's32[1]{0}', space=sflag, size = 0x4, scoped, tag = 'scoped memory for custom-call']
    %4 = vsyncpa [#allocation0], 0
    %s5 = sshll.u32 %s0, 4
    %s6 = int_to_ptr.vmem [resolvable:$true] %s5
    %8 = dma.vmem_to_hbm [thread:$0]  %s6, 512, %s2, [#allocation0]
    %9 = dma.done [#allocation0], 512
    %10 = vsyncpa [#allocation0], 1
  $region2: #{custom-call} parent=0
    #allocation1 [shape = 's32[1]{0}', space=sflag, size = 0x4, scoped, tag = 'scoped memory for custom-call']
    %11 = vsyncpa [#allocation1], 0
    %s12 = sshll.u32 %s1, 4
    %s13 = int_to_ptr.vmem [resolvable:$true] %s12
    %15 = dma.vmem_to_hbm [thread:$0]  %s13, 512, %s3, [#allocation1]
    %16 = dma.done [#allocation1], 512
    %17 = vsyncpa [#allocation1], 1

// kernel: _lambda_.1
$region0: #{_lambda_.1}
  #allocation0 [shape = 'u32[]', space=smem, size = 0x4, offset = 0x4, fixed_abs, tag = 'smem constant byte address 0x4 - core index']
  #allocation1 [shape = 'u32[144,128]{1,0:T(1,128)}', space=vmem, size = 0x12000, scoped, tag = 'internal scratch']
  %s0 = inlined_call_operand.vmem [shape: bf16[8,512], index: 0, kind: input, shape index: {}]
  %s1 = inlined_call_operand.vmem [shape: bf16[512,512], index: 1, kind: input, shape index: {}]
  %s2 = inlined_call_operand.vmem [shape: bf16[256,128], index: 2, kind: input, shape index: {}]
  %s3 = inlined_call_operand.vmem [shape: bf16[256,32], index: 3, kind: input, shape index: {}]
  %s4 = inlined_call_operand.vmem [shape: f32[152,128], index: 4, kind: input, shape index: {}]
  %s5 = inlined_call_operand.vmem [shape: f32[8,128], index: 5, kind: output, shape index: {}]
  %s6 = sld [smem:[#allocation0]]
  $region30: #{_lambda_.1} parent=0
    _
  %s8 = ssub.s32 1, %s6
  %s9 = scalar_select 0, %s8, %s6
  // Predicated region
  $region2: #{_lambda_.1} parent=0 // pred_check
    _
  $region3: #{_lambda_.1} parent=0 // pred_check_branch
    %11 = sbr.rel (0) target = $region5
  $region4: #{_lambda_.1} parent=0 // pred_region
    _
  $region5: #{_lambda_.1} parent=0 // pred_fallthru
    _
  // Predicated region
  $region6: #{_lambda_.1} parent=0 // pred_check
    _
  $region7: #{_lambda_.1} parent=0 // pred_check_branch
    %13 = sbr.rel (0) target = $region9
  $region8: #{_lambda_.1} parent=0 // pred_region
    _
  $region9: #{_lambda_.1} parent=0 // pred_fallthru
    _
  // Predicated region
  $region10: #{_lambda_.1} parent=0 // pred_check
    _
  $region11: #{_lambda_.1} parent=0 // pred_check_branch
    %15 = sbr.rel (0) target = $region13
  $region12: #{_lambda_.1} parent=0 // pred_region
    _
  $region13: #{_lambda_.1} parent=0 // pred_fallthru
    _
  // Predicated region
  $region14: #{_lambda_.1} parent=0 // pred_check
    _
  $region15: #{_lambda_.1} parent=0 // pred_check_branch
    %17 = sbr.rel (0) target = $region17
  $region16: #{_lambda_.1} parent=0 // pred_region
    _
  $region17: #{_lambda_.1} parent=0 // pred_fallthru
    _
  // Predicated region
  $region18: #{_lambda_.1} parent=0 // pred_check
    _
  $region19: #{_lambda_.1} parent=0 // pred_check_branch
    %19 = sbr.rel (0) target = $region21
  $region20: #{_lambda_.1} parent=0 // pred_region
    _
  $region21: #{_lambda_.1} parent=0 // pred_fallthru
    _
  %v21 = vld [vmem:[%s0] sm:$0xff]
  %v22 = vld [vmem:[%s0 + $0x8] sm:$0xff]
  %v23 = vld [vmem:[%s1] sm:$0xff]
  %v24 = vld [vmem:[%s1 + $0x8] sm:$0xff]
  %v25 = vld [vmem:[%s1 + $0x10] sm:$0xff]
  %v26 = vld [vmem:[%s1 + $0x18] sm:$0xff]
  %v27 = vld [vmem:[%s1 + $0x20] sm:$0xff]
  %v28 = vld [vmem:[%s1 + $0x28] sm:$0xff]
  %v29 = vld [vmem:[%s1 + $0x30] sm:$0xff]
  %v30 = vld [vmem:[%s1 + $0x38] sm:$0xff]
  %v31 = vld [vmem:[%s1 + $0x40] sm:$0xff]
  %v32 = vld [vmem:[%s1 + $0x48] sm:$0xff]
  %v33 = vld [vmem:[%s1 + $0x50] sm:$0xff]
  %v34 = vld [vmem:[%s1 + $0x58] sm:$0xff]
  %v35 = vld [vmem:[%s1 + $0x60] sm:$0xff]
  %v36 = vld [vmem:[%s1 + $0x68] sm:$0xff]
  %v37 = vld [vmem:[%s1 + $0x70] sm:$0xff]
  %v38 = vld [vmem:[%s1 + $0x78] sm:$0xff]
  %v39 = vld [vmem:[%s1 + $0x80] sm:$0xff]
  %v40 = vld [vmem:[%s1 + $0x88] sm:$0xff]
  %v41 = vld [vmem:[%s1 + $0x90] sm:$0xff]
  %v42 = vld [vmem:[%s1 + $0x98] sm:$0xff]
  %v43 = vld [vmem:[%s1 + $0xa0] sm:$0xff]
  %v44 = vld [vmem:[%s1 + $0xa8] sm:$0xff]
  %v45 = vld [vmem:[%s1 + $0xb0] sm:$0xff]
  %v46 = vld [vmem:[%s1 + $0xb8] sm:$0xff]
  %v47 = vld [vmem:[%s1 + $0xc0] sm:$0xff]
  %v48 = vld [vmem:[%s1 + $0xc8] sm:$0xff]
  %v49 = vld [vmem:[%s1 + $0xd0] sm:$0xff]
  %v50 = vld [vmem:[%s1 + $0xd8] sm:$0xff]
  %v51 = vld [vmem:[%s1 + $0xe0] sm:$0xff]
  %v52 = vld [vmem:[%s1 + $0xe8] sm:$0xff]
  %v53 = vld [vmem:[%s1 + $0xf0] sm:$0xff]
  %v54 = vld [vmem:[%s1 + $0xf8] sm:$0xff]
  %v55 = vld [vmem:[%s1 + $0x100] sm:$0xff]
  %v56 = vld [vmem:[%s1 + $0x108] sm:$0xff]
  %v57 = vld [vmem:[%s1 + $0x110] sm:$0xff]
  %v58 = vld [vmem:[%s1 + $0x118] sm:$0xff]
  %v59 = vld [vmem:[%s1 + $0x120] sm:$0xff]
  %v60 = vld [vmem:[%s1 + $0x128] sm:$0xff]
  %v61 = vld [vmem:[%s1 + $0x130] sm:$0xff]
  %v62 = vld [vmem:[%s1 + $0x138] sm:$0xff]
  %v63 = vld [vmem:[%s1 + $0x140] sm:$0xff]
  %v64 = vld [vmem:[%s1 + $0x148] sm:$0xff]
  %v65 = vld [vmem:[%s1 + $0x150] sm:$0xff]
  %v66 = vld [vmem:[%s1 + $0x158] sm:$0xff]
  %v67 = vld [vmem:[%s1 + $0x160] sm:$0xff]
  %v68 = vld [vmem:[%s1 + $0x168] sm:$0xff]
  %v69 = vld [vmem:[%s1 + $0x170] sm:$0xff]
  %v70 = vld [vmem:[%s1 + $0x178] sm:$0xff]
  %v71 = vld [vmem:[%s1 + $0x180] sm:$0xff]
  %v72 = vld [vmem:[%s1 + $0x188] sm:$0xff]
  %v73 = vld [vmem:[%s1 + $0x190] sm:$0xff]
  %v74 = vld [vmem:[%s1 + $0x198] sm:$0xff]
  %v75 = vld [vmem:[%s1 + $0x1a0] sm:$0xff]
  %v76 = vld [vmem:[%s1 + $0x1a8] sm:$0xff]
  %v77 = vld [vmem:[%s1 + $0x1b0] sm:$0xff]
  %v78 = vld [vmem:[%s1 + $0x1b8] sm:$0xff]
  %v79 = vld [vmem:[%s1 + $0x1c0] sm:$0xff]
  %v80 = vld [vmem:[%s1 + $0x1c8] sm:$0xff]
  %v81 = vld [vmem:[%s1 + $0x1d0] sm:$0xff]
  %v82 = vld [vmem:[%s1 + $0x1d8] sm:$0xff]
  %v83 = vld [vmem:[%s1 + $0x1e0] sm:$0xff]
  %v84 = vld [vmem:[%s1 + $0x1e8] sm:$0xff]
  %v85 = vld [vmem:[%s1 + $0x1f0] sm:$0xff]
  %v86 = vld [vmem:[%s1 + $0x1f8] sm:$0xff]
  %v87 = vld [vmem:[%s1 + $0x200] sm:$0xff]
  %v88 = vld [vmem:[%s1 + $0x208] sm:$0xff]
  %v89 = vld [vmem:[%s1 + $0x210] sm:$0xff]
  %v90 = vld [vmem:[%s1 + $0x218] sm:$0xff]
  %v91 = vld [vmem:[%s1 + $0x220] sm:$0xff]
  %v92 = vld [vmem:[%s1 + $0x228] sm:$0xff]
  %v93 = vld [vmem:[%s1 + $0x230] sm:$0xff]
  %v94 = vld [vmem:[%s1 + $0x238] sm:$0xff]
  %v95 = vld [vmem:[%s1 + $0x240] sm:$0xff]
  %v96 = vld [vmem:[%s1 + $0x248] sm:$0xff]
  %v97 = vld [vmem:[%s1 + $0x250] sm:$0xff]
  %v98 = vld [vmem:[%s1 + $0x258] sm:$0xff]
  %v99 = vld [vmem:[%s1 + $0x260] sm:$0xff]
  %v100 = vld [vmem:[%s1 + $0x268] sm:$0xff]
  %v101 = vld [vmem:[%s1 + $0x270] sm:$0xff]
  %v102 = vld [vmem:[%s1 + $0x278] sm:$0xff]
  %v103 = vld [vmem:[%s1 + $0x280] sm:$0xff]
  %v104 = vld [vmem:[%s1 + $0x288] sm:$0xff]
  %v105 = vld [vmem:[%s1 + $0x290] sm:$0xff]
  %v106 = vld [vmem:[%s1 + $0x298] sm:$0xff]
  %v107 = vld [vmem:[%s1 + $0x2a0] sm:$0xff]
  %v108 = vld [vmem:[%s1 + $0x2a8] sm:$0xff]
  %v109 = vld [vmem:[%s1 + $0x2b0] sm:$0xff]
  %v110 = vld [vmem:[%s1 + $0x2b8] sm:$0xff]
  %v111 = vld [vmem:[%s1 + $0x2c0] sm:$0xff]
  %v112 = vld [vmem:[%s1 + $0x2c8] sm:$0xff]
  %v113 = vld [vmem:[%s1 + $0x2d0] sm:$0xff]
  %v114 = vld [vmem:[%s1 + $0x2d8] sm:$0xff]
  %v115 = vld [vmem:[%s1 + $0x2e0] sm:$0xff]
  %v116 = vld [vmem:[%s1 + $0x2e8] sm:$0xff]
  %v117 = vld [vmem:[%s1 + $0x2f0] sm:$0xff]
  %v118 = vld [vmem:[%s1 + $0x2f8] sm:$0xff]
  %v119 = vld [vmem:[%s1 + $0x300] sm:$0xff]
  %v120 = vld [vmem:[%s1 + $0x308] sm:$0xff]
  %v121 = vld [vmem:[%s1 + $0x310] sm:$0xff]
  %v122 = vld [vmem:[%s1 + $0x318] sm:$0xff]
  %v123 = vld [vmem:[%s1 + $0x320] sm:$0xff]
  %v124 = vld [vmem:[%s1 + $0x328] sm:$0xff]
  %v125 = vld [vmem:[%s1 + $0x330] sm:$0xff]
  %v126 = vld [vmem:[%s1 + $0x338] sm:$0xff]
  %v127 = vld [vmem:[%s1 + $0x340] sm:$0xff]
  %v128 = vld [vmem:[%s1 + $0x348] sm:$0xff]
  %v129 = vld [vmem:[%s1 + $0x350] sm:$0xff]
  %v130 = vld [vmem:[%s1 + $0x358] sm:$0xff]
  %v131 = vld [vmem:[%s1 + $0x360] sm:$0xff]
  %v132 = vld [vmem:[%s1 + $0x368] sm:$0xff]
  %v133 = vld [vmem:[%s1 + $0x370] sm:$0xff]
  %v134 = vld [vmem:[%s1 + $0x378] sm:$0xff]
  %v135 = vld [vmem:[%s1 + $0x380] sm:$0xff]
  %v136 = vld [vmem:[%s1 + $0x388] sm:$0xff]
  %v137 = vld [vmem:[%s1 + $0x390] sm:$0xff]
  %v138 = vld [vmem:[%s1 + $0x398] sm:$0xff]
  %v139 = vld [vmem:[%s1 + $0x3a0] sm:$0xff]
  %v140 = vld [vmem:[%s1 + $0x3a8] sm:$0xff]
  %v141 = vld [vmem:[%s1 + $0x3b0] sm:$0xff]
  %v142 = vld [vmem:[%s1 + $0x3b8] sm:$0xff]
  %v143 = vld [vmem:[%s1 + $0x3c0] sm:$0xff]
  %v144 = vld [vmem:[%s1 + $0x3c8] sm:$0xff]
  %v145 = vld [vmem:[%s1 + $0x3d0] sm:$0xff]
  %v146 = vld [vmem:[%s1 + $0x3d8] sm:$0xff]
  %v147 = vld [vmem:[%s1 + $0x3e0] sm:$0xff]
  %v148 = vld [vmem:[%s1 + $0x3e8] sm:$0xff]
  %v149 = vld [vmem:[%s1 + $0x3f0] sm:$0xff]
  %v150 = vld [vmem:[%s1 + $0x3f8] sm:$0xff]
  %v153 = vunpack.c.l.b16 %v21
  %v154 = vunpack.c.h.b16 %v21
  %v155 = vunpack.c.l.b16 %v22
  %v156 = vunpack.c.h.b16 %v22
  %v157 = vpack.c.b16 %v153, %v153
  %v158 = vpack.c.b16 %v154, %v154
  %v159 = vpack.c.b16 %v155, %v155
  %v160 = vpack.c.b16 %v156, %v156
  %v293 = vunpack.c.l.b16 %v23
  %v294 = vunpack.c.h.b16 %v23
  %v295 = vunpack.c.l.b16 %v24
  %v296 = vunpack.c.h.b16 %v24
  %v297 = vunpack.c.l.b16 %v25
  %v298 = vunpack.c.h.b16 %v25
  %v299 = vunpack.c.l.b16 %v26
  %v300 = vunpack.c.h.b16 %v26
  %v301 = vunpack.c.l.b16 %v27
  %v302 = vunpack.c.h.b16 %v27
  %v303 = vunpack.c.l.b16 %v28
  %v304 = vunpack.c.h.b16 %v28
  %v305 = vunpack.c.l.b16 %v29
  %v306 = vunpack.c.h.b16 %v29
  %v307 = vunpack.c.l.b16 %v30
  %v308 = vunpack.c.h.b16 %v30
  %v309 = vunpack.c.l.b16 %v31
  %v310 = vunpack.c.h.b16 %v31
  %v311 = vunpack.c.l.b16 %v32
  %v312 = vunpack.c.h.b16 %v32
  %v313 = vunpack.c.l.b16 %v33
  %v314 = vunpack.c.h.b16 %v33
  %v315 = vunpack.c.l.b16 %v34
  %v316 = vunpack.c.h.b16 %v34
  %v317 = vunpack.c.l.b16 %v35
  %v318 = vunpack.c.h.b16 %v35
  %v319 = vunpack.c.l.b16 %v36
  %v320 = vunpack.c.h.b16 %v36
  %v321 = vunpack.c.l.b16 %v37
  %v322 = vunpack.c.h.b16 %v37
  %v323 = vunpack.c.l.b16 %v38
  %v324 = vunpack.c.h.b16 %v38
  %v325 = vunpack.c.l.b16 %v39
  %v326 = vunpack.c.h.b16 %v39
  %v327 = vunpack.c.l.b16 %v40
  %v328 = vunpack.c.h.b16 %v40
  %v329 = vunpack.c.l.b16 %v41
  %v330 = vunpack.c.h.b16 %v41
  %v331 = vunpack.c.l.b16 %v42
  %v332 = vunpack.c.h.b16 %v42
  %v333 = vunpack.c.l.b16 %v43
  %v334 = vunpack.c.h.b16 %v43
  %v335 = vunpack.c.l.b16 %v44
  %v336 = vunpack.c.h.b16 %v44
  %v337 = vunpack.c.l.b16 %v45
  %v338 = vunpack.c.h.b16 %v45
  %v339 = vunpack.c.l.b16 %v46
  %v340 = vunpack.c.h.b16 %v46
  %v341 = vunpack.c.l.b16 %v47
  %v342 = vunpack.c.h.b16 %v47
  %v343 = vunpack.c.l.b16 %v48
  %v344 = vunpack.c.h.b16 %v48
  %v345 = vunpack.c.l.b16 %v49
  %v346 = vunpack.c.h.b16 %v49
  %v347 = vunpack.c.l.b16 %v50
  %v348 = vunpack.c.h.b16 %v50
  %v349 = vunpack.c.l.b16 %v51
  %v350 = vunpack.c.h.b16 %v51
  %v351 = vunpack.c.l.b16 %v52
  %v352 = vunpack.c.h.b16 %v52
  %v353 = vunpack.c.l.b16 %v53
  %v354 = vunpack.c.h.b16 %v53
  %v355 = vunpack.c.l.b16 %v54
  %v356 = vunpack.c.h.b16 %v54
  %v357 = vunpack.c.l.b16 %v55
  %v358 = vunpack.c.h.b16 %v55
  %v359 = vunpack.c.l.b16 %v56
  %v360 = vunpack.c.h.b16 %v56
  %v361 = vunpack.c.l.b16 %v57
  %v362 = vunpack.c.h.b16 %v57
  %v363 = vunpack.c.l.b16 %v58
  %v364 = vunpack.c.h.b16 %v58
  %v365 = vunpack.c.l.b16 %v59
  %v366 = vunpack.c.h.b16 %v59
  %v367 = vunpack.c.l.b16 %v60
  %v368 = vunpack.c.h.b16 %v60
  %v369 = vunpack.c.l.b16 %v61
  %v370 = vunpack.c.h.b16 %v61
  %v371 = vunpack.c.l.b16 %v62
  %v372 = vunpack.c.h.b16 %v62
  %v373 = vunpack.c.l.b16 %v63
  %v374 = vunpack.c.h.b16 %v63
  %v375 = vunpack.c.l.b16 %v64
  %v376 = vunpack.c.h.b16 %v64
  %v377 = vunpack.c.l.b16 %v65
  %v378 = vunpack.c.h.b16 %v65
  %v379 = vunpack.c.l.b16 %v66
  %v380 = vunpack.c.h.b16 %v66
  %v381 = vunpack.c.l.b16 %v67
  %v382 = vunpack.c.h.b16 %v67
  %v383 = vunpack.c.l.b16 %v68
  %v384 = vunpack.c.h.b16 %v68
  %v385 = vunpack.c.l.b16 %v69
  %v386 = vunpack.c.h.b16 %v69
  %v387 = vunpack.c.l.b16 %v70
  %v388 = vunpack.c.h.b16 %v70
  %v389 = vunpack.c.l.b16 %v71
  %v390 = vunpack.c.h.b16 %v71
  %v391 = vunpack.c.l.b16 %v72
  %v392 = vunpack.c.h.b16 %v72
  %v393 = vunpack.c.l.b16 %v73
  %v394 = vunpack.c.h.b16 %v73
  %v395 = vunpack.c.l.b16 %v74
  %v396 = vunpack.c.h.b16 %v74
  %v397 = vunpack.c.l.b16 %v75
  %v398 = vunpack.c.h.b16 %v75
  %v399 = vunpack.c.l.b16 %v76
  %v400 = vunpack.c.h.b16 %v76
  %v401 = vunpack.c.l.b16 %v77
  %v402 = vunpack.c.h.b16 %v77
  %v403 = vunpack.c.l.b16 %v78
  %v404 = vunpack.c.h.b16 %v78
  %v405 = vunpack.c.l.b16 %v79
  %v406 = vunpack.c.h.b16 %v79
  %v407 = vunpack.c.l.b16 %v80
  %v408 = vunpack.c.h.b16 %v80
  %v409 = vunpack.c.l.b16 %v81
  %v410 = vunpack.c.h.b16 %v81
  %v411 = vunpack.c.l.b16 %v82
  %v412 = vunpack.c.h.b16 %v82
  %v413 = vunpack.c.l.b16 %v83
  %v414 = vunpack.c.h.b16 %v83
  %v415 = vunpack.c.l.b16 %v84
  %v416 = vunpack.c.h.b16 %v84
  %v417 = vunpack.c.l.b16 %v85
  %v418 = vunpack.c.h.b16 %v85
  %v419 = vunpack.c.l.b16 %v86
  %v420 = vunpack.c.h.b16 %v86
  %v421 = vunpack.c.l.b16 %v87
  %v422 = vunpack.c.h.b16 %v87
  %v423 = vunpack.c.l.b16 %v88
  %v424 = vunpack.c.h.b16 %v88
  %v425 = vunpack.c.l.b16 %v89
  %v426 = vunpack.c.h.b16 %v89
  %v427 = vunpack.c.l.b16 %v90
  %v428 = vunpack.c.h.b16 %v90
  %v429 = vunpack.c.l.b16 %v91
  %v430 = vunpack.c.h.b16 %v91
  %v431 = vunpack.c.l.b16 %v92
  %v432 = vunpack.c.h.b16 %v92
  %v433 = vunpack.c.l.b16 %v93
  %v434 = vunpack.c.h.b16 %v93
  %v435 = vunpack.c.l.b16 %v94
  %v436 = vunpack.c.h.b16 %v94
  %v437 = vunpack.c.l.b16 %v95
  %v438 = vunpack.c.h.b16 %v95
  %v439 = vunpack.c.l.b16 %v96
  %v440 = vunpack.c.h.b16 %v96
  %v441 = vunpack.c.l.b16 %v97
  %v442 = vunpack.c.h.b16 %v97
  %v443 = vunpack.c.l.b16 %v98
  %v444 = vunpack.c.h.b16 %v98
  %v445 = vunpack.c.l.b16 %v99
  %v446 = vunpack.c.h.b16 %v99
  %v447 = vunpack.c.l.b16 %v100
  %v448 = vunpack.c.h.b16 %v100
  %v449 = vunpack.c.l.b16 %v101
  %v450 = vunpack.c.h.b16 %v101
  %v451 = vunpack.c.l.b16 %v102
  %v452 = vunpack.c.h.b16 %v102
  %v453 = vunpack.c.l.b16 %v103
  %v454 = vunpack.c.h.b16 %v103
  %v455 = vunpack.c.l.b16 %v104
  %v456 = vunpack.c.h.b16 %v104
  %v457 = vunpack.c.l.b16 %v105
  %v458 = vunpack.c.h.b16 %v105
  %v459 = vunpack.c.l.b16 %v106
  %v460 = vunpack.c.h.b16 %v106
  %v461 = vunpack.c.l.b16 %v107
  %v462 = vunpack.c.h.b16 %v107
  %v463 = vunpack.c.l.b16 %v108
  %v464 = vunpack.c.h.b16 %v108
  %v465 = vunpack.c.l.b16 %v109
  %v466 = vunpack.c.h.b16 %v109
  %v467 = vunpack.c.l.b16 %v110
  %v468 = vunpack.c.h.b16 %v110
  %v469 = vunpack.c.l.b16 %v111
  %v470 = vunpack.c.h.b16 %v111
  %v471 = vunpack.c.l.b16 %v112
  %v472 = vunpack.c.h.b16 %v112
  %v473 = vunpack.c.l.b16 %v113
  %v474 = vunpack.c.h.b16 %v113
  %v475 = vunpack.c.l.b16 %v114
  %v476 = vunpack.c.h.b16 %v114
  %v477 = vunpack.c.l.b16 %v115
  %v478 = vunpack.c.h.b16 %v115
  %v479 = vunpack.c.l.b16 %v116
  %v480 = vunpack.c.h.b16 %v116
  %v481 = vunpack.c.l.b16 %v117
  %v482 = vunpack.c.h.b16 %v117
  %v483 = vunpack.c.l.b16 %v118
  %v484 = vunpack.c.h.b16 %v118
  %v485 = vunpack.c.l.b16 %v119
  %v486 = vunpack.c.h.b16 %v119
  %v487 = vunpack.c.l.b16 %v120
  %v488 = vunpack.c.h.b16 %v120
  %v489 = vunpack.c.l.b16 %v121
  %v490 = vunpack.c.h.b16 %v121
  %v491 = vunpack.c.l.b16 %v122
  %v492 = vunpack.c.h.b16 %v122
  %v493 = vunpack.c.l.b16 %v123
  %v494 = vunpack.c.h.b16 %v123
  %v495 = vunpack.c.l.b16 %v124
  %v496 = vunpack.c.h.b16 %v124
  %v497 = vunpack.c.l.b16 %v125
  %v498 = vunpack.c.h.b16 %v125
  %v499 = vunpack.c.l.b16 %v126
  %v500 = vunpack.c.h.b16 %v126
  %v501 = vunpack.c.l.b16 %v127
  %v502 = vunpack.c.h.b16 %v127
  %v503 = vunpack.c.l.b16 %v128
  %v504 = vunpack.c.h.b16 %v128
  %v505 = vunpack.c.l.b16 %v129
  %v506 = vunpack.c.h.b16 %v129
  %v507 = vunpack.c.l.b16 %v130
  %v508 = vunpack.c.h.b16 %v130
  %v509 = vunpack.c.l.b16 %v131
  %v510 = vunpack.c.h.b16 %v131
  %v511 = vunpack.c.l.b16 %v132
  %v512 = vunpack.c.h.b16 %v132
  %v513 = vunpack.c.l.b16 %v133
  %v514 = vunpack.c.h.b16 %v133
  %v515 = vunpack.c.l.b16 %v134
  %v516 = vunpack.c.h.b16 %v134
  %v517 = vunpack.c.l.b16 %v135
  %v518 = vunpack.c.h.b16 %v135
  %v519 = vunpack.c.l.b16 %v136
  %v520 = vunpack.c.h.b16 %v136
  %v521 = vunpack.c.l.b16 %v137
  %v522 = vunpack.c.h.b16 %v137
  %v523 = vunpack.c.l.b16 %v138
  %v524 = vunpack.c.h.b16 %v138
  %v525 = vunpack.c.l.b16 %v139
  %v526 = vunpack.c.h.b16 %v139
  %v527 = vunpack.c.l.b16 %v140
  %v528 = vunpack.c.h.b16 %v140
  %v529 = vunpack.c.l.b16 %v141
  %v530 = vunpack.c.h.b16 %v141
  %v531 = vunpack.c.l.b16 %v142
  %v532 = vunpack.c.h.b16 %v142
  %v533 = vunpack.c.l.b16 %v143
  %v534 = vunpack.c.h.b16 %v143
  %v535 = vunpack.c.l.b16 %v144
  %v536 = vunpack.c.h.b16 %v144
  %v537 = vunpack.c.l.b16 %v145
  %v538 = vunpack.c.h.b16 %v145
  %v539 = vunpack.c.l.b16 %v146
  %v540 = vunpack.c.h.b16 %v146
  %v541 = vunpack.c.l.b16 %v147
  %v542 = vunpack.c.h.b16 %v147
  %v543 = vunpack.c.l.b16 %v148
  %v544 = vunpack.c.h.b16 %v148
  %v545 = vunpack.c.l.b16 %v149
  %v546 = vunpack.c.h.b16 %v149
  %v547 = vunpack.c.l.b16 %v150
  %v548 = vunpack.c.h.b16 %v150
  %v549 = vpack.c.b16 %v297, %v293
  %v550 = vpack.c.b16 %v298, %v294
  %v551 = vpack.c.b16 %v299, %v295
  %v552 = vpack.c.b16 %v300, %v296
  %v553 = vpack.c.b16 %v305, %v301
  %v554 = vpack.c.b16 %v306, %v302
  %v555 = vpack.c.b16 %v307, %v303
  %v556 = vpack.c.b16 %v308, %v304
  %v557 = vpack.c.b16 %v313, %v309
  %v558 = vpack.c.b16 %v314, %v310
  %v559 = vpack.c.b16 %v315, %v311
  %v560 = vpack.c.b16 %v316, %v312
  %v561 = vpack.c.b16 %v321, %v317
  %v562 = vpack.c.b16 %v322, %v318
  %v563 = vpack.c.b16 %v323, %v319
  %v564 = vpack.c.b16 %v324, %v320
  %v565 = vpack.c.b16 %v329, %v325
  %v566 = vpack.c.b16 %v330, %v326
  %v567 = vpack.c.b16 %v331, %v327
  %v568 = vpack.c.b16 %v332, %v328
  %v569 = vpack.c.b16 %v337, %v333
  %v570 = vpack.c.b16 %v338, %v334
  %v571 = vpack.c.b16 %v339, %v335
  %v572 = vpack.c.b16 %v340, %v336
  %v573 = vpack.c.b16 %v345, %v341
  %v574 = vpack.c.b16 %v346, %v342
  %v575 = vpack.c.b16 %v347, %v343
  %v576 = vpack.c.b16 %v348, %v344
  %v577 = vpack.c.b16 %v353, %v349
  %v578 = vpack.c.b16 %v354, %v350
  %v579 = vpack.c.b16 %v355, %v351
  %v580 = vpack.c.b16 %v356, %v352
  %v581 = vpack.c.b16 %v361, %v357
  %v582 = vpack.c.b16 %v362, %v358
  %v583 = vpack.c.b16 %v363, %v359
  %v584 = vpack.c.b16 %v364, %v360
  %v585 = vpack.c.b16 %v369, %v365
  %v586 = vpack.c.b16 %v370, %v366
  %v587 = vpack.c.b16 %v371, %v367
  %v588 = vpack.c.b16 %v372, %v368
  %v589 = vpack.c.b16 %v377, %v373
  %v590 = vpack.c.b16 %v378, %v374
  %v591 = vpack.c.b16 %v379, %v375
  %v592 = vpack.c.b16 %v380, %v376
  %v593 = vpack.c.b16 %v385, %v381
  %v594 = vpack.c.b16 %v386, %v382
  %v595 = vpack.c.b16 %v387, %v383
  %v596 = vpack.c.b16 %v388, %v384
  %v597 = vpack.c.b16 %v393, %v389
  %v598 = vpack.c.b16 %v394, %v390
  %v599 = vpack.c.b16 %v395, %v391
  %v600 = vpack.c.b16 %v396, %v392
  %v601 = vpack.c.b16 %v401, %v397
  %v602 = vpack.c.b16 %v402, %v398
  %v603 = vpack.c.b16 %v403, %v399
  %v604 = vpack.c.b16 %v404, %v400
  %v605 = vpack.c.b16 %v409, %v405
  %v606 = vpack.c.b16 %v410, %v406
  %v607 = vpack.c.b16 %v411, %v407
  %v608 = vpack.c.b16 %v412, %v408
  %v609 = vpack.c.b16 %v417, %v413
  %v610 = vpack.c.b16 %v418, %v414
  %v611 = vpack.c.b16 %v419, %v415
  %v612 = vpack.c.b16 %v420, %v416
  %v613 = vpack.c.b16 %v425, %v421
  %v614 = vpack.c.b16 %v426, %v422
  %v615 = vpack.c.b16 %v427, %v423
  %v616 = vpack.c.b16 %v428, %v424
  %v617 = vpack.c.b16 %v433, %v429
  %v618 = vpack.c.b16 %v434, %v430
  %v619 = vpack.c.b16 %v435, %v431
  %v620 = vpack.c.b16 %v436, %v432
  %v621 = vpack.c.b16 %v441, %v437
  %v622 = vpack.c.b16 %v442, %v438
  %v623 = vpack.c.b16 %v443, %v439
  %v624 = vpack.c.b16 %v444, %v440
  %v625 = vpack.c.b16 %v449, %v445
  %v626 = vpack.c.b16 %v450, %v446
  %v627 = vpack.c.b16 %v451, %v447
  %v628 = vpack.c.b16 %v452, %v448
  %v629 = vpack.c.b16 %v457, %v453
  %v630 = vpack.c.b16 %v458, %v454
  %v631 = vpack.c.b16 %v459, %v455
  %v632 = vpack.c.b16 %v460, %v456
  %v633 = vpack.c.b16 %v465, %v461
  %v634 = vpack.c.b16 %v466, %v462
  %v635 = vpack.c.b16 %v467, %v463
  %v636 = vpack.c.b16 %v468, %v464
  %v637 = vpack.c.b16 %v473, %v469
  %v638 = vpack.c.b16 %v474, %v470
  %v639 = vpack.c.b16 %v475, %v471
  %v640 = vpack.c.b16 %v476, %v472
  %v641 = vpack.c.b16 %v481, %v477
  %v642 = vpack.c.b16 %v482, %v478
  %v643 = vpack.c.b16 %v483, %v479
  %v644 = vpack.c.b16 %v484, %v480
  %v645 = vpack.c.b16 %v489, %v485
  %v646 = vpack.c.b16 %v490, %v486
  %v647 = vpack.c.b16 %v491, %v487
  %v648 = vpack.c.b16 %v492, %v488
  %v649 = vpack.c.b16 %v497, %v493
  %v650 = vpack.c.b16 %v498, %v494
  %v651 = vpack.c.b16 %v499, %v495
  %v652 = vpack.c.b16 %v500, %v496
  %v653 = vpack.c.b16 %v505, %v501
  %v654 = vpack.c.b16 %v506, %v502
  %v655 = vpack.c.b16 %v507, %v503
  %v656 = vpack.c.b16 %v508, %v504
  %v657 = vpack.c.b16 %v513, %v509
  %v658 = vpack.c.b16 %v514, %v510
  %v659 = vpack.c.b16 %v515, %v511
  %v660 = vpack.c.b16 %v516, %v512
  %v661 = vpack.c.b16 %v521, %v517
  %v662 = vpack.c.b16 %v522, %v518
  %v663 = vpack.c.b16 %v523, %v519
  %v664 = vpack.c.b16 %v524, %v520
  %v665 = vpack.c.b16 %v529, %v525
  %v666 = vpack.c.b16 %v530, %v526
  %v667 = vpack.c.b16 %v531, %v527
  %v668 = vpack.c.b16 %v532, %v528
  %v669 = vpack.c.b16 %v537, %v533
  %v670 = vpack.c.b16 %v538, %v534
  %v671 = vpack.c.b16 %v539, %v535
  %v672 = vpack.c.b16 %v540, %v536
  %v673 = vpack.c.b16 %v545, %v541
  %v674 = vpack.c.b16 %v546, %v542
  %v675 = vpack.c.b16 %v547, %v543
  %v676 = vpack.c.b16 %v548, %v544
  %805 = vmatprep.subr.bf16.mxu0 %v550
  %806 = vmatpush1.bf16.msra.mxu0 %v549
  %807 = vmatprep.subr.bf16.mxu0 %v554
  %808 = vmatpush1.bf16.msra.mxu0 %v553
  %809 = vmatprep.subr.bf16.mxu0 %v558
  %810 = vmatpush1.bf16.msra.mxu0 %v557
  %811 = vmatprep.subr.bf16.mxu0 %v562
  %812 = vmatpush1.bf16.msra.mxu0 %v561
  %813 = vmatprep.subr.bf16.mxu0 %v566
  %814 = vmatpush1.bf16.msra.mxu0 %v565
  %815 = vmatprep.subr.bf16.mxu0 %v570
  %816 = vmatpush1.bf16.msra.mxu0 %v569
  %817 = vmatprep.subr.bf16.mxu0 %v574
  %818 = vmatpush1.bf16.msra.mxu0 %v573
  %819 = vmatprep.subr.bf16.mxu0 %v578
  %820 = vmatpush1.bf16.msra.mxu0 %v577
  %821 = vmatprep.subr.bf16.mxu0 %v582
  %822 = vmatpush1.bf16.msra.mxu0 %v581
  %823 = vmatprep.subr.bf16.mxu0 %v586
  %824 = vmatpush1.bf16.msra.mxu0 %v585
  %825 = vmatprep.subr.bf16.mxu0 %v590
  %826 = vmatpush1.bf16.msra.mxu0 %v589
  %827 = vmatprep.subr.bf16.mxu0 %v594
  %828 = vmatpush1.bf16.msra.mxu0 %v593
  %829 = vmatprep.subr.bf16.mxu0 %v598
  %830 = vmatpush1.bf16.msra.mxu0 %v597
  %831 = vmatprep.subr.bf16.mxu0 %v602
  %832 = vmatpush1.bf16.msra.mxu0 %v601
  %833 = vmatprep.subr.bf16.mxu0 %v606
  %834 = vmatpush1.bf16.msra.mxu0 %v605
  %835 = vmatprep.subr.bf16.mxu0 %v610
  %836 = vmatpush1.bf16.msra.mxu0 %v609
  %837 = vmatprep.mubr.bf16.mxu0 %v158
  %838 = vmatmul.mubr.bf16.gmra.mrb[0].mxu0 %v157
  %v839 = vpop.f32.mrb[0].mxu0
  %v840 = vadd.f32 0.0, %v839
  %v841 = vpop.f32.mrb[0].mxu0
  %v842 = vadd.f32 0.0, %v841
  %v843 = vpop.f32.mrb[0].mxu0
  %v844 = vpop.f32.mrb[0].mxu0
  %845 = vdwg.mxu0
  %846 = vmatprep.subr.bf16.mxu0 %v614
  %847 = vmatpush1.bf16.msra.mxu0 %v613
  %848 = vmatprep.subr.bf16.mxu0 %v618
  %849 = vmatpush1.bf16.msra.mxu0 %v617
  %850 = vmatprep.subr.bf16.mxu0 %v622
  %851 = vmatpush1.bf16.msra.mxu0 %v621
  %852 = vmatprep.subr.bf16.mxu0 %v626
  %853 = vmatpush1.bf16.msra.mxu0 %v625
  %854 = vmatprep.subr.bf16.mxu0 %v630
  %855 = vmatpush1.bf16.msra.mxu0 %v629
  %856 = vmatprep.subr.bf16.mxu0 %v634
  %857 = vmatpush1.bf16.msra.mxu0 %v633
  %858 = vmatprep.subr.bf16.mxu0 %v638
  %859 = vmatpush1.bf16.msra.mxu0 %v637
  %860 = vmatprep.subr.bf16.mxu0 %v642
  %861 = vmatpush1.bf16.msra.mxu0 %v641
  %862 = vmatprep.subr.bf16.mxu0 %v646
  %863 = vmatpush1.bf16.msra.mxu0 %v645
  %864 = vmatprep.subr.bf16.mxu0 %v650
  %865 = vmatpush1.bf16.msra.mxu0 %v649
  %866 = vmatprep.subr.bf16.mxu0 %v654
  %867 = vmatpush1.bf16.msra.mxu0 %v653
  %868 = vmatprep.subr.bf16.mxu0 %v658
  %869 = vmatpush1.bf16.msra.mxu0 %v657
  %870 = vmatprep.subr.bf16.mxu0 %v662
  %871 = vmatpush1.bf16.msra.mxu0 %v661
  %872 = vmatprep.subr.bf16.mxu0 %v666
  %873 = vmatpush1.bf16.msra.mxu0 %v665
  %874 = vmatprep.subr.bf16.mxu0 %v670
  %875 = vmatpush1.bf16.msra.mxu0 %v669
  %876 = vmatprep.subr.bf16.mxu0 %v674
  %877 = vmatpush1.bf16.msra.mxu0 %v673
  %878 = vmatprep.mubr.bf16.mxu0 %v160
  %879 = vmatmul.mubr.bf16.gmra.mrb[0].mxu0 %v159
  %v880 = vpop.f32.mrb[0].mxu0
  %v881 = vadd.f32 %v840, %v880
  %v882 = vpop.f32.mrb[0].mxu0
  %v883 = vadd.f32 %v842, %v882
  %v884 = vpop.f32.mrb[0].mxu0
  %v885 = vpop.f32.mrb[0].mxu0
  %886 = vdwg.mxu0
  %887 = vmatprep.subr.bf16.mxu0 %v552
  %888 = vmatpush1.bf16.msra.mxu0 %v551
  %889 = vmatprep.subr.bf16.mxu0 %v556
  %890 = vmatpush1.bf16.msra.mxu0 %v555
  %891 = vmatprep.subr.bf16.mxu0 %v560
  %892 = vmatpush1.bf16.msra.mxu0 %v559
  %893 = vmatprep.subr.bf16.mxu0 %v564
  %894 = vmatpush1.bf16.msra.mxu0 %v563
  %895 = vmatprep.subr.bf16.mxu0 %v568
  %896 = vmatpush1.bf16.msra.mxu0 %v567
  %897 = vmatprep.subr.bf16.mxu0 %v572
  %898 = vmatpush1.bf16.msra.mxu0 %v571
  %899 = vmatprep.subr.bf16.mxu0 %v576
  %900 = vmatpush1.bf16.msra.mxu0 %v575
  %901 = vmatprep.subr.bf16.mxu0 %v580
  %902 = vmatpush1.bf16.msra.mxu0 %v579
  %903 = vmatprep.subr.bf16.mxu0 %v584
  %904 = vmatpush1.bf16.msra.mxu0 %v583
  %905 = vmatprep.subr.bf16.mxu0 %v588
  %906 = vmatpush1.bf16.msra.mxu0 %v587
  %907 = vmatprep.subr.bf16.mxu0 %v592
  %908 = vmatpush1.bf16.msra.mxu0 %v591
  %909 = vmatprep.subr.bf16.mxu0 %v596
  %910 = vmatpush1.bf16.msra.mxu0 %v595
  %911 = vmatprep.subr.bf16.mxu0 %v600
  %912 = vmatpush1.bf16.msra.mxu0 %v599
  %913 = vmatprep.subr.bf16.mxu0 %v604
  %914 = vmatpush1.bf16.msra.mxu0 %v603
  %915 = vmatprep.subr.bf16.mxu0 %v608
  %916 = vmatpush1.bf16.msra.mxu0 %v607
  %917 = vmatprep.subr.bf16.mxu0 %v612
  %918 = vmatpush1.bf16.msra.mxu0 %v611
  %919 = vmatprep.mubr.bf16.mxu0 %v158
  %920 = vmatmul.mubr.bf16.gmra.mrb[0].mxu0 %v157
  %v921 = vpop.f32.mrb[0].mxu0
  %v922 = vadd.f32 0.0, %v921
  %v923 = vpop.f32.mrb[0].mxu0
  %v924 = vadd.f32 0.0, %v923
  %v925 = vpop.f32.mrb[0].mxu0
  %v926 = vpop.f32.mrb[0].mxu0
  %927 = vdwg.mxu0
  %928 = vmatprep.subr.bf16.mxu0 %v616
  %929 = vmatpush1.bf16.msra.mxu0 %v615
  %930 = vmatprep.subr.bf16.mxu0 %v620
  %931 = vmatpush1.bf16.msra.mxu0 %v619
  %932 = vmatprep.subr.bf16.mxu0 %v624
  %933 = vmatpush1.bf16.msra.mxu0 %v623
  %934 = vmatprep.subr.bf16.mxu0 %v628
  %935 = vmatpush1.bf16.msra.mxu0 %v627
  %936 = vmatprep.subr.bf16.mxu0 %v632
  %937 = vmatpush1.bf16.msra.mxu0 %v631
  %938 = vmatprep.subr.bf16.mxu0 %v636
  %939 = vmatpush1.bf16.msra.mxu0 %v635
  %940 = vmatprep.subr.bf16.mxu0 %v640
  %941 = vmatpush1.bf16.msra.mxu0 %v639
  %942 = vmatprep.subr.bf16.mxu0 %v644
  %943 = vmatpush1.bf16.msra.mxu0 %v643
  %944 = vmatprep.subr.bf16.mxu0 %v648
  %945 = vmatpush1.bf16.msra.mxu0 %v647
  %946 = vmatprep.subr.bf16.mxu0 %v652
  %947 = vmatpush1.bf16.msra.mxu0 %v651
  %948 = vmatprep.subr.bf16.mxu0 %v656
  %949 = vmatpush1.bf16.msra.mxu0 %v655
  %950 = vmatprep.subr.bf16.mxu0 %v660
  %951 = vmatpush1.bf16.msra.mxu0 %v659
  %952 = vmatprep.subr.bf16.mxu0 %v664
  %953 = vmatpush1.bf16.msra.mxu0 %v663
  %954 = vmatprep.subr.bf16.mxu0 %v668
  %955 = vmatpush1.bf16.msra.mxu0 %v667
  %956 = vmatprep.subr.bf16.mxu0 %v672
  %957 = vmatpush1.bf16.msra.mxu0 %v671
  %958 = vmatprep.subr.bf16.mxu0 %v676
  %959 = vmatpush1.bf16.msra.mxu0 %v675
  %960 = vmatprep.mubr.bf16.mxu0 %v160
  %961 = vmatmul.mubr.bf16.gmra.mrb[0].mxu0 %v159
  %v962 = vpop.f32.mrb[0].mxu0
  %v963 = vadd.f32 %v922, %v962
  %v964 = vpop.f32.mrb[0].mxu0
  %v965 = vadd.f32 %v924, %v964
  %v966 = vpop.f32.mrb[0].mxu0
  %v967 = vpop.f32.mrb[0].mxu0
  %968 = vdwg.mxu0
  %v969 = vld [vmem:[%s2] sm:$0xf]
  %v970 = vld [vmem:[%s2 + $0x4] sm:$0xf]
  %v971 = vld [vmem:[%s2 + $0x8] sm:$0xf]
  %v972 = vld [vmem:[%s2 + $0xc] sm:$0xf]
  %v973 = vld [vmem:[%s2 + $0x10] sm:$0xf]
  %v974 = vld [vmem:[%s2 + $0x14] sm:$0xf]
  %v975 = vld [vmem:[%s2 + $0x18] sm:$0xf]
  %v976 = vld [vmem:[%s2 + $0x1c] sm:$0xf]
  %v977 = vld [vmem:[%s2 + $0x20] sm:$0xf]
  %v978 = vld [vmem:[%s2 + $0x24] sm:$0xf]
  %v979 = vld [vmem:[%s2 + $0x28] sm:$0xf]
  %v980 = vld [vmem:[%s2 + $0x2c] sm:$0xf]
  %v981 = vld [vmem:[%s2 + $0x30] sm:$0xf]
  %v982 = vld [vmem:[%s2 + $0x34] sm:$0xf]
  %v983 = vld [vmem:[%s2 + $0x38] sm:$0xf]
  %v984 = vld [vmem:[%s2 + $0x3c] sm:$0xf]
  %v985 = vld [vmem:[%s2 + $0x40] sm:$0xf]
  %v986 = vld [vmem:[%s2 + $0x44] sm:$0xf]
  %v987 = vld [vmem:[%s2 + $0x48] sm:$0xf]
  %v988 = vld [vmem:[%s2 + $0x4c] sm:$0xf]
  %v989 = vld [vmem:[%s2 + $0x50] sm:$0xf]
  %v990 = vld [vmem:[%s2 + $0x54] sm:$0xf]
  %v991 = vld [vmem:[%s2 + $0x58] sm:$0xf]
  %v992 = vld [vmem:[%s2 + $0x5c] sm:$0xf]
  %v993 = vld [vmem:[%s2 + $0x60] sm:$0xf]
  %v994 = vld [vmem:[%s2 + $0x64] sm:$0xf]
  %v995 = vld [vmem:[%s2 + $0x68] sm:$0xf]
  %v996 = vld [vmem:[%s2 + $0x6c] sm:$0xf]
  %v997 = vld [vmem:[%s2 + $0x70] sm:$0xf]
  %v998 = vld [vmem:[%s2 + $0x74] sm:$0xf]
  %v999 = vld [vmem:[%s2 + $0x78] sm:$0xf]
  %v1000 = vld [vmem:[%s2 + $0x7c] sm:$0xf]
  %v1001 = vld [vmem:[%s3] sm:$0xf]
  %v1002 = vld [vmem:[%s3 + $0x4] sm:$0xf]
  %v1003 = vld [vmem:[%s3 + $0x8] sm:$0xf]
  %v1004 = vld [vmem:[%s3 + $0xc] sm:$0xf]
  %v1005 = vld [vmem:[%s3 + $0x10] sm:$0xf]
  %v1006 = vld [vmem:[%s3 + $0x14] sm:$0xf]
  %v1007 = vld [vmem:[%s3 + $0x18] sm:$0xf]
  %v1008 = vld [vmem:[%s3 + $0x1c] sm:$0xf]
  %v1009 = vld [vmem:[%s3 + $0x20] sm:$0xf]
  %v1010 = vld [vmem:[%s3 + $0x24] sm:$0xf]
  %v1011 = vld [vmem:[%s3 + $0x28] sm:$0xf]
  %v1012 = vld [vmem:[%s3 + $0x2c] sm:$0xf]
  %v1013 = vld [vmem:[%s3 + $0x30] sm:$0xf]
  %v1014 = vld [vmem:[%s3 + $0x34] sm:$0xf]
  %v1015 = vld [vmem:[%s3 + $0x38] sm:$0xf]
  %v1016 = vld [vmem:[%s3 + $0x3c] sm:$0xf]
  %v1017 = vld [vmem:[%s3 + $0x40] sm:$0xf]
  %v1018 = vld [vmem:[%s3 + $0x44] sm:$0xf]
  %v1019 = vld [vmem:[%s3 + $0x48] sm:$0xf]
  %v1020 = vld [vmem:[%s3 + $0x4c] sm:$0xf]
  %v1021 = vld [vmem:[%s3 + $0x50] sm:$0xf]
  %v1022 = vld [vmem:[%s3 + $0x54] sm:$0xf]
  %v1023 = vld [vmem:[%s3 + $0x58] sm:$0xf]
  %v1024 = vld [vmem:[%s3 + $0x5c] sm:$0xf]
  %v1025 = vld [vmem:[%s3 + $0x60] sm:$0xf]
  %v1026 = vld [vmem:[%s3 + $0x64] sm:$0xf]
  %v1027 = vld [vmem:[%s3 + $0x68] sm:$0xf]
  %v1028 = vld [vmem:[%s3 + $0x6c] sm:$0xf]
  %v1029 = vld [vmem:[%s3 + $0x70] sm:$0xf]
  %v1030 = vld [vmem:[%s3 + $0x74] sm:$0xf]
  %v1031 = vld [vmem:[%s3 + $0x78] sm:$0xf]
  %v1032 = vld [vmem:[%s3 + $0x7c] sm:$0xf]
  %v1033 = vld [vmem:[%s4 + $0x88] sm:$0x1]
  %v1034 = vld [vmem:[%s4 + $0x90] sm:$0x1]
  %v1035 = vmax.f32 %v881, 0.0
  %v1036 = vpack.c.bf16 %v1035, %v1035
  %v1037 = vsub.f32 0.0, %v881
  %v1038 = vmax.f32 %v1037, 0.0
  %v1039 = vpack.c.bf16 %v1038, %v1038
  %v1056 = vunpack.c.l.b16 %v985
  %v1057 = vunpack.c.l.b16 %v986
  %v1058 = vunpack.c.l.b16 %v987
  %v1059 = vunpack.c.l.b16 %v988
  %v1060 = vunpack.c.l.b16 %v989
  %v1061 = vunpack.c.l.b16 %v990
  %v1062 = vunpack.c.l.b16 %v991
  %v1063 = vunpack.c.l.b16 %v992
  %v1064 = vunpack.c.l.b16 %v993
  %v1065 = vunpack.c.l.b16 %v994
  %v1066 = vunpack.c.l.b16 %v995
  %v1067 = vunpack.c.l.b16 %v996
  %v1068 = vunpack.c.l.b16 %v997
  %v1069 = vunpack.c.l.b16 %v998
  %v1070 = vunpack.c.l.b16 %v999
  %v1071 = vunpack.c.l.b16 %v1000
  %v1072 = vpack.c.b16 %v1057, %v1056
  %v1073 = vpack.c.b16 %v1059, %v1058
  %v1074 = vpack.c.b16 %v1061, %v1060
  %v1075 = vpack.c.b16 %v1063, %v1062
  %v1076 = vpack.c.b16 %v1065, %v1064
  %v1077 = vpack.c.b16 %v1067, %v1066
  %v1078 = vpack.c.b16 %v1069, %v1068
  %v1079 = vpack.c.b16 %v1071, %v1070
  %1088 = vmatprep.subr.bf16.mxu0 0
  %1089 = vmatpush1.bf16.msra.mxu0 %v1072
  %1090 = vmatprep.subr.bf16.mxu0 0
  %1091 = vmatpush1.bf16.msra.mxu0 %v1073
  %1092 = vmatprep.subr.bf16.mxu0 0
  %1093 = vmatpush1.bf16.msra.mxu0 %v1074
  %1094 = vmatprep.subr.bf16.mxu0 0
  %1095 = vmatpush1.bf16.msra.mxu0 %v1075
  %1096 = vmatprep.subr.bf16.mxu0 0
  %1097 = vmatpush1.bf16.msra.mxu0 %v1076
  %1098 = vmatprep.subr.bf16.mxu0 0
  %1099 = vmatpush1.bf16.msra.mxu0 %v1077
  %1100 = vmatprep.subr.bf16.mxu0 0
  %1101 = vmatpush1.bf16.msra.mxu0 %v1078
  %1102 = vmatprep.subr.bf16.mxu0 0
  %1103 = vmatpush1.bf16.msra.mxu0 %v1079
  %1104 = vmatprep.subr.bf16.mxu0 0
  %1105 = vmatpush1.bf16.msra.mxu0 0
  %1106 = vmatprep.subr.bf16.mxu0 0
  %1107 = vmatpush1.bf16.msra.mxu0 0
  %1108 = vmatprep.subr.bf16.mxu0 0
  %1109 = vmatpush1.bf16.msra.mxu0 0
  %1110 = vmatprep.subr.bf16.mxu0 0
  %1111 = vmatpush1.bf16.msra.mxu0 0
  %1112 = vmatprep.subr.bf16.mxu0 0
  %1113 = vmatpush1.bf16.msra.mxu0 0
  %1114 = vmatprep.subr.bf16.mxu0 0
  %1115 = vmatpush1.bf16.msra.mxu0 0
  %1116 = vmatprep.subr.bf16.mxu0 0
  %1117 = vmatpush1.bf16.msra.mxu0 0
  %1118 = vmatprep.subr.bf16.mxu0 0
  %1119 = vmatpush1.bf16.msra.mxu0 0
  %1120 = vmatprep.mubr.bf16.mxu0 0
  %1121 = vmatmul.mubr.bf16.gmra.mrb[0].mxu0 %v1039
  %v1122 = vpop.f32.mrb[0].mxu0
  %v1123 = vadd.f32 0.0, %v1122
  %v1124 = vpop.f32.mrb[0].mxu0
  %v1125 = vpop.f32.mrb[0].mxu0
  %v1126 = vpop.f32.mrb[0].mxu0
  %1127 = vdwg.mxu0
  %v1144 = vunpack.c.l.b16 %v969
  %v1145 = vunpack.c.l.b16 %v970
  %v1146 = vunpack.c.l.b16 %v971
  %v1147 = vunpack.c.l.b16 %v972
  %v1148 = vunpack.c.l.b16 %v973
  %v1149 = vunpack.c.l.b16 %v974
  %v1150 = vunpack.c.l.b16 %v975
  %v1151 = vunpack.c.l.b16 %v976
  %v1152 = vunpack.c.l.b16 %v977
  %v1153 = vunpack.c.l.b16 %v978
  %v1154 = vunpack.c.l.b16 %v979
  %v1155 = vunpack.c.l.b16 %v980
  %v1156 = vunpack.c.l.b16 %v981
  %v1157 = vunpack.c.l.b16 %v982
  %v1158 = vunpack.c.l.b16 %v983
  %v1159 = vunpack.c.l.b16 %v984
  %v1160 = vpack.c.b16 %v1145, %v1144
  %v1161 = vpack.c.b16 %v1147, %v1146
  %v1162 = vpack.c.b16 %v1149, %v1148
  %v1163 = vpack.c.b16 %v1151, %v1150
  %v1164 = vpack.c.b16 %v1153, %v1152
  %v1165 = vpack.c.b16 %v1155, %v1154
  %v1166 = vpack.c.b16 %v1157, %v1156
  %v1167 = vpack.c.b16 %v1159, %v1158
  %1176 = vmatprep.subr.bf16.mxu0 0
  %1177 = vmatpush1.bf16.msra.mxu0 %v1160
  %1178 = vmatprep.subr.bf16.mxu0 0
  %1179 = vmatpush1.bf16.msra.mxu0 %v1161
  %1180 = vmatprep.subr.bf16.mxu0 0
  %1181 = vmatpush1.bf16.msra.mxu0 %v1162
  %1182 = vmatprep.subr.bf16.mxu0 0
  %1183 = vmatpush1.bf16.msra.mxu0 %v1163
  %1184 = vmatprep.subr.bf16.mxu0 0
  %1185 = vmatpush1.bf16.msra.mxu0 %v1164
  %1186 = vmatprep.subr.bf16.mxu0 0
  %1187 = vmatpush1.bf16.msra.mxu0 %v1165
  %1188 = vmatprep.subr.bf16.mxu0 0
  %1189 = vmatpush1.bf16.msra.mxu0 %v1166
  %1190 = vmatprep.subr.bf16.mxu0 0
  %1191 = vmatpush1.bf16.msra.mxu0 %v1167
  %1192 = vmatprep.subr.bf16.mxu0 0
  %1193 = vmatpush1.bf16.msra.mxu0 0
  %1194 = vmatprep.subr.bf16.mxu0 0
  %1195 = vmatpush1.bf16.msra.mxu0 0
  %1196 = vmatprep.subr.bf16.mxu0 0
  %1197 = vmatpush1.bf16.msra.mxu0 0
  %1198 = vmatprep.subr.bf16.mxu0 0
  %1199 = vmatpush1.bf16.msra.mxu0 0
  %1200 = vmatprep.subr.bf16.mxu0 0
  %1201 = vmatpush1.bf16.msra.mxu0 0
  %1202 = vmatprep.subr.bf16.mxu0 0
  %1203 = vmatpush1.bf16.msra.mxu0 0
  %1204 = vmatprep.subr.bf16.mxu0 0
  %1205 = vmatpush1.bf16.msra.mxu0 0
  %1206 = vmatprep.subr.bf16.mxu0 0
  %1207 = vmatpush1.bf16.msra.mxu0 0
  %1208 = vmatprep.mubr.bf16.mxu0 0
  %1209 = vmatmul.mubr.bf16.gmra.mrb[0].mxu0 %v1036
  %v1210 = vpop.f32.mrb[0].mxu0
  %v1211 = vadd.f32 %v1123, %v1210
  %v1212 = vpop.f32.mrb[0].mxu0
  %v1213 = vpop.f32.mrb[0].mxu0
  %v1214 = vpop.f32.mrb[0].mxu0
  %1215 = vdwg.mxu0
  %v1216 = vlaneseq
  %v1217 = vshrl.u32 %v1216, 7
  %v1218 = vsub.s32 0, %v1217
  %v1219 = vrot.slane %v1033, %v1218
  %v1220 = vadd.f32 %v1211, %v1219
  %v1221 = vmax.f32 %v1220, 0.0
  %v1222 = vpack.c.bf16 %v1221, %v1221
  %v1223 = vsub.f32 0.0, %v1220
  %v1224 = vmax.f32 %v1223, 0.0
  %v1225 = vpack.c.bf16 %v1224, %v1224
  %v1242 = vunpack.c.l.b16 %v1017
  %v1243 = vunpack.c.l.b16 %v1018
  %v1244 = vunpack.c.l.b16 %v1019
  %v1245 = vunpack.c.l.b16 %v1020
  %v1246 = vunpack.c.l.b16 %v1021
  %v1247 = vunpack.c.l.b16 %v1022
  %v1248 = vunpack.c.l.b16 %v1023
  %v1249 = vunpack.c.l.b16 %v1024
  %v1250 = vunpack.c.l.b16 %v1025
  %v1251 = vunpack.c.l.b16 %v1026
  %v1252 = vunpack.c.l.b16 %v1027
  %v1253 = vunpack.c.l.b16 %v1028
  %v1254 = vunpack.c.l.b16 %v1029
  %v1255 = vunpack.c.l.b16 %v1030
  %v1256 = vunpack.c.l.b16 %v1031
  %v1257 = vunpack.c.l.b16 %v1032
  %v1258 = vpack.c.b16 %v1243, %v1242
  %v1259 = vpack.c.b16 %v1245, %v1244
  %v1260 = vpack.c.b16 %v1247, %v1246
  %v1261 = vpack.c.b16 %v1249, %v1248
  %v1262 = vpack.c.b16 %v1251, %v1250
  %v1263 = vpack.c.b16 %v1253, %v1252
  %v1264 = vpack.c.b16 %v1255, %v1254
  %v1265 = vpack.c.b16 %v1257, %v1256
  %1274 = vmatprep.subr.bf16.mxu0 0
  %1275 = vmatpush1.bf16.msra.mxu0 %v1258
  %1276 = vmatprep.subr.bf16.mxu0 0
  %1277 = vmatpush1.bf16.msra.mxu0 %v1259
  %1278 = vmatprep.subr.bf16.mxu0 0
  %1279 = vmatpush1.bf16.msra.mxu0 %v1260
  %1280 = vmatprep.subr.bf16.mxu0 0
  %1281 = vmatpush1.bf16.msra.mxu0 %v1261
  %1282 = vmatprep.subr.bf16.mxu0 0
  %1283 = vmatpush1.bf16.msra.mxu0 %v1262
  %1284 = vmatprep.subr.bf16.mxu0 0
  %1285 = vmatpush1.bf16.msra.mxu0 %v1263
  %1286 = vmatprep.subr.bf16.mxu0 0
  %1287 = vmatpush1.bf16.msra.mxu0 %v1264
  %1288 = vmatprep.subr.bf16.mxu0 0
  %1289 = vmatpush1.bf16.msra.mxu0 %v1265
  %1290 = vmatprep.subr.bf16.mxu0 0
  %1291 = vmatpush1.bf16.msra.mxu0 0
  %1292 = vmatprep.subr.bf16.mxu0 0
  %1293 = vmatpush1.bf16.msra.mxu0 0
  %1294 = vmatprep.subr.bf16.mxu0 0
  %1295 = vmatpush1.bf16.msra.mxu0 0
  %1296 = vmatprep.subr.bf16.mxu0 0
  %1297 = vmatpush1.bf16.msra.mxu0 0
  %1298 = vmatprep.subr.bf16.mxu0 0
  %1299 = vmatpush1.bf16.msra.mxu0 0
  %1300 = vmatprep.subr.bf16.mxu0 0
  %1301 = vmatpush1.bf16.msra.mxu0 0
  %1302 = vmatprep.subr.bf16.mxu0 0
  %1303 = vmatpush1.bf16.msra.mxu0 0
  %1304 = vmatprep.subr.bf16.mxu0 0
  %1305 = vmatpush1.bf16.msra.mxu0 0
  %1306 = vmatprep.mubr.bf16.mxu0 0
  %1307 = vmatmul.mubr.bf16.gmra.mrb[0].mxu0 %v1225
  %v1308 = vpop.f32.mrb[0].mxu0
  %v1309 = vadd.f32 0.0, %v1308
  %v1310 = vpop.f32.mrb[0].mxu0
  %v1311 = vpop.f32.mrb[0].mxu0
  %v1312 = vpop.f32.mrb[0].mxu0
  %1313 = vdwg.mxu0
  %v1330 = vunpack.c.l.b16 %v1001
  %v1331 = vunpack.c.l.b16 %v1002
  %v1332 = vunpack.c.l.b16 %v1003
  %v1333 = vunpack.c.l.b16 %v1004
  %v1334 = vunpack.c.l.b16 %v1005
  %v1335 = vunpack.c.l.b16 %v1006
  %v1336 = vunpack.c.l.b16 %v1007
  %v1337 = vunpack.c.l.b16 %v1008
  %v1338 = vunpack.c.l.b16 %v1009
  %v1339 = vunpack.c.l.b16 %v1010
  %v1340 = vunpack.c.l.b16 %v1011
  %v1341 = vunpack.c.l.b16 %v1012
  %v1342 = vunpack.c.l.b16 %v1013
  %v1343 = vunpack.c.l.b16 %v1014
  %v1344 = vunpack.c.l.b16 %v1015
  %v1345 = vunpack.c.l.b16 %v1016
  %v1346 = vpack.c.b16 %v1331, %v1330
  %v1347 = vpack.c.b16 %v1333, %v1332
  %v1348 = vpack.c.b16 %v1335, %v1334
  %v1349 = vpack.c.b16 %v1337, %v1336
  %v1350 = vpack.c.b16 %v1339, %v1338
  %v1351 = vpack.c.b16 %v1341, %v1340
  %v1352 = vpack.c.b16 %v1343, %v1342
  %v1353 = vpack.c.b16 %v1345, %v1344
  %1362 = vmatprep.subr.bf16.mxu0 0
  %1363 = vmatpush1.bf16.msra.mxu0 %v1346
  %1364 = vmatprep.subr.bf16.mxu0 0
  %1365 = vmatpush1.bf16.msra.mxu0 %v1347
  %1366 = vmatprep.subr.bf16.mxu0 0
  %1367 = vmatpush1.bf16.msra.mxu0 %v1348
  %1368 = vmatprep.subr.bf16.mxu0 0
  %1369 = vmatpush1.bf16.msra.mxu0 %v1349
  %1370 = vmatprep.subr.bf16.mxu0 0
  %1371 = vmatpush1.bf16.msra.mxu0 %v1350
  %1372 = vmatprep.subr.bf16.mxu0 0
  %1373 = vmatpush1.bf16.msra.mxu0 %v1351
  %1374 = vmatprep.subr.bf16.mxu0 0
  %1375 = vmatpush1.bf16.msra.mxu0 %v1352
  %1376 = vmatprep.subr.bf16.mxu0 0
  %1377 = vmatpush1.bf16.msra.mxu0 %v1353
  %1378 = vmatprep.subr.bf16.mxu0 0
  %1379 = vmatpush1.bf16.msra.mxu0 0
  %1380 = vmatprep.subr.bf16.mxu0 0
  %1381 = vmatpush1.bf16.msra.mxu0 0
  %1382 = vmatprep.subr.bf16.mxu0 0
  %1383 = vmatpush1.bf16.msra.mxu0 0
  %1384 = vmatprep.subr.bf16.mxu0 0
  %1385 = vmatpush1.bf16.msra.mxu0 0
  %1386 = vmatprep.subr.bf16.mxu0 0
  %1387 = vmatpush1.bf16.msra.mxu0 0
  %1388 = vmatprep.subr.bf16.mxu0 0
  %1389 = vmatpush1.bf16.msra.mxu0 0
  %1390 = vmatprep.subr.bf16.mxu0 0
  %1391 = vmatpush1.bf16.msra.mxu0 0
  %1392 = vmatprep.subr.bf16.mxu0 0
  %1393 = vmatpush1.bf16.msra.mxu0 0
  %1394 = vmatprep.mubr.bf16.mxu0 0
  %1395 = vmatmul.mubr.bf16.gmra.mrb[0].mxu0 %v1222
  %v1396 = vpop.f32.mrb[0].mxu0
  %v1397 = vadd.f32 %v1309, %v1396
  %v1398 = vpop.f32.mrb[0].mxu0
  %v1399 = vpop.f32.mrb[0].mxu0
  %v1400 = vpop.f32.mrb[0].mxu0
  %1401 = vdwg.mxu0
  %v1402 = vlaneseq
  %v1403 = vshrl.u32 %v1402, 7
  %v1404 = vsub.s32 0, %v1403
  %v1405 = vrot.slane %v1034, %v1404
  %v1406 = vadd.f32 %v1397, %v1405
  %v1407 = vmax.f32 %v883, 0.0
  %v1408 = vpack.c.bf16 %v1407, %v1407
  %v1409 = vsub.f32 0.0, %v883
  %v1410 = vmax.f32 %v1409, 0.0
  %v1411 = vpack.c.bf16 %v1410, %v1410
  %1412 = vmatprep.subr.bf16.mxu0 0
  %1413 = vmatpush1.bf16.msra.mxu0 %v1072
  %1414 = vmatprep.subr.bf16.mxu0 0
  %1415 = vmatpush1.bf16.msra.mxu0 %v1073
  %1416 = vmatprep.subr.bf16.mxu0 0
  %1417 = vmatpush1.bf16.msra.mxu0 %v1074
  %1418 = vmatprep.subr.bf16.mxu0 0
  %1419 = vmatpush1.bf16.msra.mxu0 %v1075
  %1420 = vmatprep.subr.bf16.mxu0 0
  %1421 = vmatpush1.bf16.msra.mxu0 %v1076
  %1422 = vmatprep.subr.bf16.mxu0 0
  %1423 = vmatpush1.bf16.msra.mxu0 %v1077
  %1424 = vmatprep.subr.bf16.mxu0 0
  %1425 = vmatpush1.bf16.msra.mxu0 %v1078
  %1426 = vmatprep.subr.bf16.mxu0 0
  %1427 = vmatpush1.bf16.msra.mxu0 %v1079
  %1428 = vmatprep.subr.bf16.mxu0 0
  %1429 = vmatpush1.bf16.msra.mxu0 0
  %1430 = vmatprep.subr.bf16.mxu0 0
  %1431 = vmatpush1.bf16.msra.mxu0 0
  %1432 = vmatprep.subr.bf16.mxu0 0
  %1433 = vmatpush1.bf16.msra.mxu0 0
  %1434 = vmatprep.subr.bf16.mxu0 0
  %1435 = vmatpush1.bf16.msra.mxu0 0
  %1436 = vmatprep.subr.bf16.mxu0 0
  %1437 = vmatpush1.bf16.msra.mxu0 0
  %1438 = vmatprep.subr.bf16.mxu0 0
  %1439 = vmatpush1.bf16.msra.mxu0 0
  %1440 = vmatprep.subr.bf16.mxu0 0
  %1441 = vmatpush1.bf16.msra.mxu0 0
  %1442 = vmatprep.subr.bf16.mxu0 0
  %1443 = vmatpush1.bf16.msra.mxu0 0
  %1444 = vmatprep.mubr.bf16.mxu0 0
  %1445 = vmatmul.mubr.bf16.gmra.mrb[0].mxu0 %v1411
  %v1446 = vpop.f32.mrb[0].mxu0
  %v1447 = vadd.f32 0.0, %v1446
  %v1448 = vpop.f32.mrb[0].mxu0
  %v1449 = vpop.f32.mrb[0].mxu0
  %v1450 = vpop.f32.mrb[0].mxu0
  %1451 = vdwg.mxu0
  %1452 = vmatprep.subr.bf16.mxu0 0
  %1453 = vmatpush1.bf16.msra.mxu0 %v1160
  %1454 = vmatprep.subr.bf16.mxu0 0
  %1455 = vmatpush1.bf16.msra.mxu0 %v1161
  %1456 = vmatprep.subr.bf16.mxu0 0
  %1457 = vmatpush1.bf16.msra.mxu0 %v1162
  %1458 = vmatprep.subr.bf16.mxu0 0
  %1459 = vmatpush1.bf16.msra.mxu0 %v1163
  %1460 = vmatprep.subr.bf16.mxu0 0
  %1461 = vmatpush1.bf16.msra.mxu0 %v1164
  %1462 = vmatprep.subr.bf16.mxu0 0
  %1463 = vmatpush1.bf16.msra.mxu0 %v1165
  %1464 = vmatprep.subr.bf16.mxu0 0
  %1465 = vmatpush1.bf16.msra.mxu0 %v1166
  %1466 = vmatprep.subr.bf16.mxu0 0
  %1467 = vmatpush1.bf16.msra.mxu0 %v1167
  %1468 = vmatprep.subr.bf16.mxu0 0
  %1469 = vmatpush1.bf16.msra.mxu0 0
  %1470 = vmatprep.subr.bf16.mxu0 0
  %1471 = vmatpush1.bf16.msra.mxu0 0
  %1472 = vmatprep.subr.bf16.mxu0 0
  %1473 = vmatpush1.bf16.msra.mxu0 0
  %1474 = vmatprep.subr.bf16.mxu0 0
  %1475 = vmatpush1.bf16.msra.mxu0 0
  %1476 = vmatprep.subr.bf16.mxu0 0
  %1477 = vmatpush1.bf16.msra.mxu0 0
  %1478 = vmatprep.subr.bf16.mxu0 0
  %1479 = vmatpush1.bf16.msra.mxu0 0
  %1480 = vmatprep.subr.bf16.mxu0 0
  %1481 = vmatpush1.bf16.msra.mxu0 0
  %1482 = vmatprep.subr.bf16.mxu0 0
  %1483 = vmatpush1.bf16.msra.mxu0 0
  %1484 = vmatprep.mubr.bf16.mxu0 0
  %1485 = vmatmul.mubr.bf16.gmra.mrb[0].mxu0 %v1408
  %v1486 = vpop.f32.mrb[0].mxu0
  %v1487 = vadd.f32 %v1447, %v1486
  %v1488 = vpop.f32.mrb[0].mxu0
  %v1489 = vpop.f32.mrb[0].mxu0
  %v1490 = vpop.f32.mrb[0].mxu0
  %1491 = vdwg.mxu0
  %v1492 = vadd.f32 %v1487, %v1219
  %v1493 = vmax.f32 %v1492, 0.0
  %v1494 = vpack.c.bf16 %v1493, %v1493
  %v1495 = vsub.f32 0.0, %v1492
  %v1496 = vmax.f32 %v1495, 0.0
  %v1497 = vpack.c.bf16 %v1496, %v1496
  %1498 = vmatprep.subr.bf16.mxu0 0
  %1499 = vmatpush1.bf16.msra.mxu0 %v1258
  %1500 = vmatprep.subr.bf16.mxu0 0
  %1501 = vmatpush1.bf16.msra.mxu0 %v1259
  %1502 = vmatprep.subr.bf16.mxu0 0
  %1503 = vmatpush1.bf16.msra.mxu0 %v1260
  %1504 = vmatprep.subr.bf16.mxu0 0
  %1505 = vmatpush1.bf16.msra.mxu0 %v1261
  %1506 = vmatprep.subr.bf16.mxu0 0
  %1507 = vmatpush1.bf16.msra.mxu0 %v1262
  %1508 = vmatprep.subr.bf16.mxu0 0
  %1509 = vmatpush1.bf16.msra.mxu0 %v1263
  %1510 = vmatprep.subr.bf16.mxu0 0
  %1511 = vmatpush1.bf16.msra.mxu0 %v1264
  %1512 = vmatprep.subr.bf16.mxu0 0
  %1513 = vmatpush1.bf16.msra.mxu0 %v1265
  %1514 = vmatprep.subr.bf16.mxu0 0
  %1515 = vmatpush1.bf16.msra.mxu0 0
  %1516 = vmatprep.subr.bf16.mxu0 0
  %1517 = vmatpush1.bf16.msra.mxu0 0
  %1518 = vmatprep.subr.bf16.mxu0 0
  %1519 = vmatpush1.bf16.msra.mxu0 0
  %1520 = vmatprep.subr.bf16.mxu0 0
  %1521 = vmatpush1.bf16.msra.mxu0 0
  %1522 = vmatprep.subr.bf16.mxu0 0
  %1523 = vmatpush1.bf16.msra.mxu0 0
  %1524 = vmatprep.subr.bf16.mxu0 0
  %1525 = vmatpush1.bf16.msra.mxu0 0
  %1526 = vmatprep.subr.bf16.mxu0 0
  %1527 = vmatpush1.bf16.msra.mxu0 0
  %1528 = vmatprep.subr.bf16.mxu0 0
  %1529 = vmatpush1.bf16.msra.mxu0 0
  %1530 = vmatprep.mubr.bf16.mxu0 0
  %1531 = vmatmul.mubr.bf16.gmra.mrb[0].mxu0 %v1497
  %v1532 = vpop.f32.mrb[0].mxu0
  %v1533 = vadd.f32 0.0, %v1532
  %v1534 = vpop.f32.mrb[0].mxu0
  %v1535 = vpop.f32.mrb[0].mxu0
  %v1536 = vpop.f32.mrb[0].mxu0
  %1537 = vdwg.mxu0
  %1538 = vmatprep.subr.bf16.mxu0 0
  %1539 = vmatpush1.bf16.msra.mxu0 %v1346
  %1540 = vmatprep.subr.bf16.mxu0 0
  %1541 = vmatpush1.bf16.msra.mxu0 %v1347
  %1542 = vmatprep.subr.bf16.mxu0 0
  %1543 = vmatpush1.bf16.msra.mxu0 %v1348
  %1544 = vmatprep.subr.bf16.mxu0 0
  %1545 = vmatpush1.bf16.msra.mxu0 %v1349
  %1546 = vmatprep.subr.bf16.mxu0 0
  %1547 = vmatpush1.bf16.msra.mxu0 %v1350
  %1548 = vmatprep.subr.bf16.mxu0 0
  %1549 = vmatpush1.bf16.msra.mxu0 %v1351
  %1550 = vmatprep.subr.bf16.mxu0 0
  %1551 = vmatpush1.bf16.msra.mxu0 %v1352
  %1552 = vmatprep.subr.bf16.mxu0 0
  %1553 = vmatpush1.bf16.msra.mxu0 %v1353
  %1554 = vmatprep.subr.bf16.mxu0 0
  %1555 = vmatpush1.bf16.msra.mxu0 0
  %1556 = vmatprep.subr.bf16.mxu0 0
  %1557 = vmatpush1.bf16.msra.mxu0 0
  %1558 = vmatprep.subr.bf16.mxu0 0
  %1559 = vmatpush1.bf16.msra.mxu0 0
  %1560 = vmatprep.subr.bf16.mxu0 0
  %1561 = vmatpush1.bf16.msra.mxu0 0
  %1562 = vmatprep.subr.bf16.mxu0 0
  %1563 = vmatpush1.bf16.msra.mxu0 0
  %1564 = vmatprep.subr.bf16.mxu0 0
  %1565 = vmatpush1.bf16.msra.mxu0 0
  %1566 = vmatprep.subr.bf16.mxu0 0
  %1567 = vmatpush1.bf16.msra.mxu0 0
  %1568 = vmatprep.subr.bf16.mxu0 0
  %1569 = vmatpush1.bf16.msra.mxu0 0
  %1570 = vmatprep.mubr.bf16.mxu0 0
  %1571 = vmatmul.mubr.bf16.gmra.mrb[0].mxu0 %v1494
  %v1572 = vpop.f32.mrb[0].mxu0
  %v1573 = vadd.f32 %v1533, %v1572
  %v1574 = vpop.f32.mrb[0].mxu0
  %v1575 = vpop.f32.mrb[0].mxu0
  %v1576 = vpop.f32.mrb[0].mxu0
  %1577 = vdwg.mxu0
  %v1578 = vadd.f32 %v1573, %v1405
  %v1579 = vmax.f32 %v963, 0.0
  %v1580 = vpack.c.bf16 %v1579, %v1579
  %v1581 = vsub.f32 0.0, %v963
  %v1582 = vmax.f32 %v1581, 0.0
  %v1583 = vpack.c.bf16 %v1582, %v1582
  %1584 = vmatprep.subr.bf16.mxu0 0
  %1585 = vmatpush1.bf16.msra.mxu0 %v1072
  %1586 = vmatprep.subr.bf16.mxu0 0
  %1587 = vmatpush1.bf16.msra.mxu0 %v1073
  %1588 = vmatprep.subr.bf16.mxu0 0
  %1589 = vmatpush1.bf16.msra.mxu0 %v1074
  %1590 = vmatprep.subr.bf16.mxu0 0
  %1591 = vmatpush1.bf16.msra.mxu0 %v1075
  %1592 = vmatprep.subr.bf16.mxu0 0
  %1593 = vmatpush1.bf16.msra.mxu0 %v1076
  %1594 = vmatprep.subr.bf16.mxu0 0
  %1595 = vmatpush1.bf16.msra.mxu0 %v1077
  %1596 = vmatprep.subr.bf16.mxu0 0
  %1597 = vmatpush1.bf16.msra.mxu0 %v1078
  %1598 = vmatprep.subr.bf16.mxu0 0
  %1599 = vmatpush1.bf16.msra.mxu0 %v1079
  %1600 = vmatprep.subr.bf16.mxu0 0
  %1601 = vmatpush1.bf16.msra.mxu0 0
  %1602 = vmatprep.subr.bf16.mxu0 0
  %1603 = vmatpush1.bf16.msra.mxu0 0
  %1604 = vmatprep.subr.bf16.mxu0 0
  %1605 = vmatpush1.bf16.msra.mxu0 0
  %1606 = vmatprep.subr.bf16.mxu0 0
  %1607 = vmatpush1.bf16.msra.mxu0 0
  %1608 = vmatprep.subr.bf16.mxu0 0
  %1609 = vmatpush1.bf16.msra.mxu0 0
  %1610 = vmatprep.subr.bf16.mxu0 0
  %1611 = vmatpush1.bf16.msra.mxu0 0
  %1612 = vmatprep.subr.bf16.mxu0 0
  %1613 = vmatpush1.bf16.msra.mxu0 0
  %1614 = vmatprep.subr.bf16.mxu0 0
  %1615 = vmatpush1.bf16.msra.mxu0 0
  %1616 = vmatprep.mubr.bf16.mxu0 0
  %1617 = vmatmul.mubr.bf16.gmra.mrb[0].mxu0 %v1583
  %v1618 = vpop.f32.mrb[0].mxu0
  %v1619 = vadd.f32 0.0, %v1618
  %v1620 = vpop.f32.mrb[0].mxu0
  %v1621 = vpop.f32.mrb[0].mxu0
  %v1622 = vpop.f32.mrb[0].mxu0
  %1623 = vdwg.mxu0
  %1624 = vmatprep.subr.bf16.mxu0 0
  %1625 = vmatpush1.bf16.msra.mxu0 %v1160
  %1626 = vmatprep.subr.bf16.mxu0 0
  %1627 = vmatpush1.bf16.msra.mxu0 %v1161
  %1628 = vmatprep.subr.bf16.mxu0 0
  %1629 = vmatpush1.bf16.msra.mxu0 %v1162
  %1630 = vmatprep.subr.bf16.mxu0 0
  %1631 = vmatpush1.bf16.msra.mxu0 %v1163
  %1632 = vmatprep.subr.bf16.mxu0 0
  %1633 = vmatpush1.bf16.msra.mxu0 %v1164
  %1634 = vmatprep.subr.bf16.mxu0 0
  %1635 = vmatpush1.bf16.msra.mxu0 %v1165
  %1636 = vmatprep.subr.bf16.mxu0 0
  %1637 = vmatpush1.bf16.msra.mxu0 %v1166
  %1638 = vmatprep.subr.bf16.mxu0 0
  %1639 = vmatpush1.bf16.msra.mxu0 %v1167
  %1640 = vmatprep.subr.bf16.mxu0 0
  %1641 = vmatpush1.bf16.msra.mxu0 0
  %1642 = vmatprep.subr.bf16.mxu0 0
  %1643 = vmatpush1.bf16.msra.mxu0 0
  %1644 = vmatprep.subr.bf16.mxu0 0
  %1645 = vmatpush1.bf16.msra.mxu0 0
  %1646 = vmatprep.subr.bf16.mxu0 0
  %1647 = vmatpush1.bf16.msra.mxu0 0
  %1648 = vmatprep.subr.bf16.mxu0 0
  %1649 = vmatpush1.bf16.msra.mxu0 0
  %1650 = vmatprep.subr.bf16.mxu0 0
  %1651 = vmatpush1.bf16.msra.mxu0 0
  %1652 = vmatprep.subr.bf16.mxu0 0
  %1653 = vmatpush1.bf16.msra.mxu0 0
  %1654 = vmatprep.subr.bf16.mxu0 0
  %1655 = vmatpush1.bf16.msra.mxu0 0
  %1656 = vmatprep.mubr.bf16.mxu0 0
  %1657 = vmatmul.mubr.bf16.gmra.mrb[0].mxu0 %v1580
  %v1658 = vpop.f32.mrb[0].mxu0
  %v1659 = vadd.f32 %v1619, %v1658
  %v1660 = vpop.f32.mrb[0].mxu0
  %v1661 = vpop.f32.mrb[0].mxu0
  %v1662 = vpop.f32.mrb[0].mxu0
  %1663 = vdwg.mxu0
  %v1664 = vadd.f32 %v1659, %v1219
  %v1665 = vmax.f32 %v1664, 0.0
  %v1666 = vpack.c.bf16 %v1665, %v1665
  %v1667 = vsub.f32 0.0, %v1664
  %v1668 = vmax.f32 %v1667, 0.0
  %v1669 = vpack.c.bf16 %v1668, %v1668
  %1670 = vmatprep.subr.bf16.mxu0 0
  %1671 = vmatpush1.bf16.msra.mxu0 %v1258
  %1672 = vmatprep.subr.bf16.mxu0 0
  %1673 = vmatpush1.bf16.msra.mxu0 %v1259
  %1674 = vmatprep.subr.bf16.mxu0 0
  %1675 = vmatpush1.bf16.msra.mxu0 %v1260
  %1676 = vmatprep.subr.bf16.mxu0 0
  %1677 = vmatpush1.bf16.msra.mxu0 %v1261
  %1678 = vmatprep.subr.bf16.mxu0 0
  %1679 = vmatpush1.bf16.msra.mxu0 %v1262
  %1680 = vmatprep.subr.bf16.mxu0 0
  %1681 = vmatpush1.bf16.msra.mxu0 %v1263
  %1682 = vmatprep.subr.bf16.mxu0 0
  %1683 = vmatpush1.bf16.msra.mxu0 %v1264
  %1684 = vmatprep.subr.bf16.mxu0 0
  %1685 = vmatpush1.bf16.msra.mxu0 %v1265
  %1686 = vmatprep.subr.bf16.mxu0 0
  %1687 = vmatpush1.bf16.msra.mxu0 0
  %1688 = vmatprep.subr.bf16.mxu0 0
  %1689 = vmatpush1.bf16.msra.mxu0 0
  %1690 = vmatprep.subr.bf16.mxu0 0
  %1691 = vmatpush1.bf16.msra.mxu0 0
  %1692 = vmatprep.subr.bf16.mxu0 0
  %1693 = vmatpush1.bf16.msra.mxu0 0
  %1694 = vmatprep.subr.bf16.mxu0 0
  %1695 = vmatpush1.bf16.msra.mxu0 0
  %1696 = vmatprep.subr.bf16.mxu0 0
  %1697 = vmatpush1.bf16.msra.mxu0 0
  %1698 = vmatprep.subr.bf16.mxu0 0
  %1699 = vmatpush1.bf16.msra.mxu0 0
  %1700 = vmatprep.subr.bf16.mxu0 0
  %1701 = vmatpush1.bf16.msra.mxu0 0
  %1702 = vmatprep.mubr.bf16.mxu0 0
  %1703 = vmatmul.mubr.bf16.gmra.mrb[0].mxu0 %v1669
  %v1704 = vpop.f32.mrb[0].mxu0
  %v1705 = vadd.f32 0.0, %v1704
  %v1706 = vpop.f32.mrb[0].mxu0
  %v1707 = vpop.f32.mrb[0].mxu0
  %v1708 = vpop.f32.mrb[0].mxu0
  %1709 = vdwg.mxu0
  %1710 = vmatprep.subr.bf16.mxu0 0
  %1711 = vmatpush1.bf16.msra.mxu0 %v1346
  %1712 = vmatprep.subr.bf16.mxu0 0
  %1713 = vmatpush1.bf16.msra.mxu0 %v1347
  %1714 = vmatprep.subr.bf16.mxu0 0
  %1715 = vmatpush1.bf16.msra.mxu0 %v1348
  %1716 = vmatprep.subr.bf16.mxu0 0
  %1717 = vmatpush1.bf16.msra.mxu0 %v1349
  %1718 = vmatprep.subr.bf16.mxu0 0
  %1719 = vmatpush1.bf16.msra.mxu0 %v1350
  %1720 = vmatprep.subr.bf16.mxu0 0
  %1721 = vmatpush1.bf16.msra.mxu0 %v1351
  %1722 = vmatprep.subr.bf16.mxu0 0
  %1723 = vmatpush1.bf16.msra.mxu0 %v1352
  %1724 = vmatprep.subr.bf16.mxu0 0
  %1725 = vmatpush1.bf16.msra.mxu0 %v1353
  %1726 = vmatprep.subr.bf16.mxu0 0
  %1727 = vmatpush1.bf16.msra.mxu0 0
  %1728 = vmatprep.subr.bf16.mxu0 0
  %1729 = vmatpush1.bf16.msra.mxu0 0
  %1730 = vmatprep.subr.bf16.mxu0 0
  %1731 = vmatpush1.bf16.msra.mxu0 0
  %1732 = vmatprep.subr.bf16.mxu0 0
  %1733 = vmatpush1.bf16.msra.mxu0 0
  %1734 = vmatprep.subr.bf16.mxu0 0
  %1735 = vmatpush1.bf16.msra.mxu0 0
  %1736 = vmatprep.subr.bf16.mxu0 0
  %1737 = vmatpush1.bf16.msra.mxu0 0
  %1738 = vmatprep.subr.bf16.mxu0 0
  %1739 = vmatpush1.bf16.msra.mxu0 0
  %1740 = vmatprep.subr.bf16.mxu0 0
  %1741 = vmatpush1.bf16.msra.mxu0 0
  %1742 = vmatprep.mubr.bf16.mxu0 0
  %1743 = vmatmul.mubr.bf16.gmra.mrb[0].mxu0 %v1666
  %v1744 = vpop.f32.mrb[0].mxu0
  %v1745 = vadd.f32 %v1705, %v1744
  %v1746 = vpop.f32.mrb[0].mxu0
  %v1747 = vpop.f32.mrb[0].mxu0
  %v1748 = vpop.f32.mrb[0].mxu0
  %1749 = vdwg.mxu0
  %v1750 = vadd.f32 %v1745, %v1405
  %v1751 = vmax.f32 %v965, 0.0
  %v1752 = vpack.c.bf16 %v1751, %v1751
  %v1753 = vsub.f32 0.0, %v965
  %v1754 = vmax.f32 %v1753, 0.0
  %v1755 = vpack.c.bf16 %v1754, %v1754
  %1756 = vmatprep.subr.bf16.mxu0 0
  %1757 = vmatpush1.bf16.msra.mxu0 %v1072
  %1758 = vmatprep.subr.bf16.mxu0 0
  %1759 = vmatpush1.bf16.msra.mxu0 %v1073
  %1760 = vmatprep.subr.bf16.mxu0 0
  %1761 = vmatpush1.bf16.msra.mxu0 %v1074
  %1762 = vmatprep.subr.bf16.mxu0 0
  %1763 = vmatpush1.bf16.msra.mxu0 %v1075
  %1764 = vmatprep.subr.bf16.mxu0 0
  %1765 = vmatpush1.bf16.msra.mxu0 %v1076
  %1766 = vmatprep.subr.bf16.mxu0 0
  %1767 = vmatpush1.bf16.msra.mxu0 %v1077
  %1768 = vmatprep.subr.bf16.mxu0 0
  %1769 = vmatpush1.bf16.msra.mxu0 %v1078
  %1770 = vmatprep.subr.bf16.mxu0 0
  %1771 = vmatpush1.bf16.msra.mxu0 %v1079
  %1772 = vmatprep.subr.bf16.mxu0 0
  %1773 = vmatpush1.bf16.msra.mxu0 0
  %1774 = vmatprep.subr.bf16.mxu0 0
  %1775 = vmatpush1.bf16.msra.mxu0 0
  %1776 = vmatprep.subr.bf16.mxu0 0
  %1777 = vmatpush1.bf16.msra.mxu0 0
  %1778 = vmatprep.subr.bf16.mxu0 0
  %1779 = vmatpush1.bf16.msra.mxu0 0
  %1780 = vmatprep.subr.bf16.mxu0 0
  %1781 = vmatpush1.bf16.msra.mxu0 0
  %1782 = vmatprep.subr.bf16.mxu0 0
  %1783 = vmatpush1.bf16.msra.mxu0 0
  %1784 = vmatprep.subr.bf16.mxu0 0
  %1785 = vmatpush1.bf16.msra.mxu0 0
  %1786 = vmatprep.subr.bf16.mxu0 0
  %1787 = vmatpush1.bf16.msra.mxu0 0
  %1788 = vmatprep.mubr.bf16.mxu0 0
  %1789 = vmatmul.mubr.bf16.gmra.mrb[0].mxu0 %v1755
  %v1790 = vpop.f32.mrb[0].mxu0
  %v1791 = vadd.f32 0.0, %v1790
  %v1792 = vpop.f32.mrb[0].mxu0
  %v1793 = vpop.f32.mrb[0].mxu0
  %v1794 = vpop.f32.mrb[0].mxu0
  %1795 = vdwg.mxu0
  %1796 = vmatprep.subr.bf16.mxu0 0
  %1797 = vmatpush1.bf16.msra.mxu0 %v1160
  %1798 = vmatprep.subr.bf16.mxu0 0
  %1799 = vmatpush1.bf16.msra.mxu0 %v1161
  %1800 = vmatprep.subr.bf16.mxu0 0
  %1801 = vmatpush1.bf16.msra.mxu0 %v1162
  %1802 = vmatprep.subr.bf16.mxu0 0
  %1803 = vmatpush1.bf16.msra.mxu0 %v1163
  %1804 = vmatprep.subr.bf16.mxu0 0
  %1805 = vmatpush1.bf16.msra.mxu0 %v1164
  %1806 = vmatprep.subr.bf16.mxu0 0
  %1807 = vmatpush1.bf16.msra.mxu0 %v1165
  %1808 = vmatprep.subr.bf16.mxu0 0
  %1809 = vmatpush1.bf16.msra.mxu0 %v1166
  %1810 = vmatprep.subr.bf16.mxu0 0
  %1811 = vmatpush1.bf16.msra.mxu0 %v1167
  %1812 = vmatprep.subr.bf16.mxu0 0
  %1813 = vmatpush1.bf16.msra.mxu0 0
  %1814 = vmatprep.subr.bf16.mxu0 0
  %1815 = vmatpush1.bf16.msra.mxu0 0
  %1816 = vmatprep.subr.bf16.mxu0 0
  %1817 = vmatpush1.bf16.msra.mxu0 0
  %1818 = vmatprep.subr.bf16.mxu0 0
  %1819 = vmatpush1.bf16.msra.mxu0 0
  %1820 = vmatprep.subr.bf16.mxu0 0
  %1821 = vmatpush1.bf16.msra.mxu0 0
  %1822 = vmatprep.subr.bf16.mxu0 0
  %1823 = vmatpush1.bf16.msra.mxu0 0
  %1824 = vmatprep.subr.bf16.mxu0 0
  %1825 = vmatpush1.bf16.msra.mxu0 0
  %1826 = vmatprep.subr.bf16.mxu0 0
  %1827 = vmatpush1.bf16.msra.mxu0 0
  %1828 = vmatprep.mubr.bf16.mxu0 0
  %1829 = vmatmul.mubr.bf16.gmra.mrb[0].mxu0 %v1752
  %v1830 = vpop.f32.mrb[0].mxu0
  %v1831 = vadd.f32 %v1791, %v1830
  %v1832 = vpop.f32.mrb[0].mxu0
  %v1833 = vpop.f32.mrb[0].mxu0
  %v1834 = vpop.f32.mrb[0].mxu0
  %1835 = vdwg.mxu0
  %v1836 = vadd.f32 %v1831, %v1219
  %v1837 = vmax.f32 %v1836, 0.0
  %v1838 = vpack.c.bf16 %v1837, %v1837
  %v1839 = vsub.f32 0.0, %v1836
  %v1840 = vmax.f32 %v1839, 0.0
  %v1841 = vpack.c.bf16 %v1840, %v1840
  %1842 = vmatprep.subr.bf16.mxu0 0
  %1843 = vmatpush1.bf16.msra.mxu0 %v1258
  %1844 = vmatprep.subr.bf16.mxu0 0
  %1845 = vmatpush1.bf16.msra.mxu0 %v1259
  %1846 = vmatprep.subr.bf16.mxu0 0
  %1847 = vmatpush1.bf16.msra.mxu0 %v1260
  %1848 = vmatprep.subr.bf16.mxu0 0
  %1849 = vmatpush1.bf16.msra.mxu0 %v1261
  %1850 = vmatprep.subr.bf16.mxu0 0
  %1851 = vmatpush1.bf16.msra.mxu0 %v1262
  %1852 = vmatprep.subr.bf16.mxu0 0
  %1853 = vmatpush1.bf16.msra.mxu0 %v1263
  %1854 = vmatprep.subr.bf16.mxu0 0
  %1855 = vmatpush1.bf16.msra.mxu0 %v1264
  %1856 = vmatprep.subr.bf16.mxu0 0
  %1857 = vmatpush1.bf16.msra.mxu0 %v1265
  %1858 = vmatprep.subr.bf16.mxu0 0
  %1859 = vmatpush1.bf16.msra.mxu0 0
  %1860 = vmatprep.subr.bf16.mxu0 0
  %1861 = vmatpush1.bf16.msra.mxu0 0
  %1862 = vmatprep.subr.bf16.mxu0 0
  %1863 = vmatpush1.bf16.msra.mxu0 0
  %1864 = vmatprep.subr.bf16.mxu0 0
  %1865 = vmatpush1.bf16.msra.mxu0 0
  %1866 = vmatprep.subr.bf16.mxu0 0
  %1867 = vmatpush1.bf16.msra.mxu0 0
  %1868 = vmatprep.subr.bf16.mxu0 0
  %1869 = vmatpush1.bf16.msra.mxu0 0
  %1870 = vmatprep.subr.bf16.mxu0 0
  %1871 = vmatpush1.bf16.msra.mxu0 0
  %1872 = vmatprep.subr.bf16.mxu0 0
  %1873 = vmatpush1.bf16.msra.mxu0 0
  %1874 = vmatprep.mubr.bf16.mxu0 0
  %1875 = vmatmul.mubr.bf16.gmra.mrb[0].mxu0 %v1841
  %v1876 = vpop.f32.mrb[0].mxu0
  %v1877 = vadd.f32 0.0, %v1876
  %v1878 = vpop.f32.mrb[0].mxu0
  %v1879 = vpop.f32.mrb[0].mxu0
  %v1880 = vpop.f32.mrb[0].mxu0
  %1881 = vdwg.mxu0
  %1882 = vmatprep.subr.bf16.mxu0 0
  %1883 = vmatpush1.bf16.msra.mxu0 %v1346
  %1884 = vmatprep.subr.bf16.mxu0 0
  %1885 = vmatpush1.bf16.msra.mxu0 %v1347
  %1886 = vmatprep.subr.bf16.mxu0 0
  %1887 = vmatpush1.bf16.msra.mxu0 %v1348
  %1888 = vmatprep.subr.bf16.mxu0 0
  %1889 = vmatpush1.bf16.msra.mxu0 %v1349
  %1890 = vmatprep.subr.bf16.mxu0 0
  %1891 = vmatpush1.bf16.msra.mxu0 %v1350
  %1892 = vmatprep.subr.bf16.mxu0 0
  %1893 = vmatpush1.bf16.msra.mxu0 %v1351
  %1894 = vmatprep.subr.bf16.mxu0 0
  %1895 = vmatpush1.bf16.msra.mxu0 %v1352
  %1896 = vmatprep.subr.bf16.mxu0 0
  %1897 = vmatpush1.bf16.msra.mxu0 %v1353
  %1898 = vmatprep.subr.bf16.mxu0 0
  %1899 = vmatpush1.bf16.msra.mxu0 0
  %1900 = vmatprep.subr.bf16.mxu0 0
  %1901 = vmatpush1.bf16.msra.mxu0 0
  %1902 = vmatprep.subr.bf16.mxu0 0
  %1903 = vmatpush1.bf16.msra.mxu0 0
  %1904 = vmatprep.subr.bf16.mxu0 0
  %1905 = vmatpush1.bf16.msra.mxu0 0
  %1906 = vmatprep.subr.bf16.mxu0 0
  %1907 = vmatpush1.bf16.msra.mxu0 0
  %1908 = vmatprep.subr.bf16.mxu0 0
  %1909 = vmatpush1.bf16.msra.mxu0 0
  %1910 = vmatprep.subr.bf16.mxu0 0
  %1911 = vmatpush1.bf16.msra.mxu0 0
  %1912 = vmatprep.subr.bf16.mxu0 0
  %1913 = vmatpush1.bf16.msra.mxu0 0
  %1914 = vmatprep.mubr.bf16.mxu0 0
  %1915 = vmatmul.mubr.bf16.gmra.mrb[0].mxu0 %v1838
  %v1916 = vpop.f32.mrb[0].mxu0
  %v1917 = vadd.f32 %v1877, %v1916
  %v1918 = vpop.f32.mrb[0].mxu0
  %v1919 = vpop.f32.mrb[0].mxu0
  %v1920 = vpop.f32.mrb[0].mxu0
  %1921 = vdwg.mxu0
  %v1922 = vadd.f32 %v1917, %v1405
  %1924 = vrot.lane.b32.xlu0 %v1578, 32
  %v1925 = vpop.permute.xlu0 %1924
  %1928 = vrot.lane.b32.xlu0 %v1750, 64
  %v1929 = vpop.permute.xlu0 %1928
  %1932 = vrot.lane.b32.xlu0 %v1922, 96
  %v1933 = vpop.permute.xlu0 %1932
  %vm1935 = vcmask 261120
  %v1936 = vsel %vm1935, %v1406, %v1925
  %vm1937 = vcmask 523264
  %v1938 = vsel %vm1937, %v1936, %v1929
  %vm1939 = vcmask 785408
  %v1940 = vsel %vm1939, %v1938, %v1933
  %v1942 = vrot.slane %v1940, 1
  %v1944 = vrot.slane %v1940, 7
  %vm1946 = vcmask 1040384
  %v1947 = vsel %vm1946, %v1940, %v1942
  %vm1948 = vcmask 1041408
  %v1949 = vsel %vm1948, %v1947, %v1944
  %vm1950 = vcmask 1042432
  %v1951 = vsel %vm1950, %v1949, %v1940
  %vm1952 = vcmask 1043456
  %v1953 = vsel %vm1952, %v1951, %v1940
  %vm1954 = vcmask 1044480
  %v1955 = vsel %vm1954, %v1953, %v1942
  %vm1956 = vcmask 1045504
  %v1957 = vsel %vm1956, %v1955, %v1944
  %vm1958 = vcmask 1046528
  %v1959 = vsel %vm1958, %v1957, %v1940
  %v1960 = vld [vmem:[%s4] sm:$0xff]
  %v1961 = vld [vmem:[%s4 + $0x8] sm:$0xff]
  %v1962 = vld [vmem:[%s4 + $0x10] sm:$0xff]
  %v1963 = vld [vmem:[%s4 + $0x18] sm:$0xff]
  %v1964 = vld [vmem:[%s4 + $0x20] sm:$0xff]
  %v1965 = vld [vmem:[%s4 + $0x28] sm:$0xff]
  %v1966 = vld [vmem:[%s4 + $0x30] sm:$0xff]
  %v1967 = vld [vmem:[%s4 + $0x38] sm:$0xff]
  %v1968 = vld [vmem:[%s4 + $0x40] sm:$0xff]
  %v1969 = vld [vmem:[%s4 + $0x48] sm:$0xff]
  %v1970 = vld [vmem:[%s4 + $0x50] sm:$0xff]
  %v1971 = vld [vmem:[%s4 + $0x58] sm:$0xff]
  %v1972 = vld [vmem:[%s4 + $0x60] sm:$0xff]
  %v1973 = vld [vmem:[%s4 + $0x68] sm:$0xff]
  %v1974 = vld [vmem:[%s4 + $0x70] sm:$0xff]
  %v1975 = vld [vmem:[%s4 + $0x78] sm:$0xff]
  %1976 = vmatprep.subr.mxu0 0.0
  %1977 = vmatpush1.msra.mxu0 %v1960
  %1978 = vmatprep.subr.mxu0 0.0
  %1979 = vmatpush1.msra.mxu0 %v1961
  %1980 = vmatprep.subr.mxu0 0.0
  %1981 = vmatpush1.msra.mxu0 %v1962
  %1982 = vmatprep.subr.mxu0 0.0
  %1983 = vmatpush1.msra.mxu0 %v1963
  %1984 = vmatprep.subr.mxu0 0.0
  %1985 = vmatpush1.msra.mxu0 %v1964
  %1986 = vmatprep.subr.mxu0 0.0
  %1987 = vmatpush1.msra.mxu0 %v1965
  %1988 = vmatprep.subr.mxu0 0.0
  %1989 = vmatpush1.msra.mxu0 %v1966
  %1990 = vmatprep.subr.mxu0 0.0
  %1991 = vmatpush1.msra.mxu0 %v1967
  %1992 = vmatprep.subr.mxu0 0.0
  %1993 = vmatpush1.msra.mxu0 %v1968
  %1994 = vmatprep.subr.mxu0 0.0
  %1995 = vmatpush1.msra.mxu0 %v1969
  %1996 = vmatprep.subr.mxu0 0.0
  %1997 = vmatpush1.msra.mxu0 %v1970
  %1998 = vmatprep.subr.mxu0 0.0
  %1999 = vmatpush1.msra.mxu0 %v1971
  %2000 = vmatprep.subr.mxu0 0.0
  %2001 = vmatpush1.msra.mxu0 %v1972
  %2002 = vmatprep.subr.mxu0 0.0
  %2003 = vmatpush1.msra.mxu0 %v1973
  %2004 = vmatprep.subr.mxu0 0.0
  %2005 = vmatpush1.msra.mxu0 %v1974
  %2006 = vmatprep.subr.mxu0 0.0
  %2007 = vmatpush1.msra.mxu0 %v1975
  %2008 = vmatprep.subr.mxu0 0.0
  %2009 = vmatpush1.msra.mxu0 0.0
  %2010 = vmatprep.subr.mxu0 0.0
  %2011 = vmatpush1.msra.mxu0 0.0
  %2012 = vmatprep.subr.mxu0 0.0
  %2013 = vmatpush1.msra.mxu0 0.0
  %2014 = vmatprep.subr.mxu0 0.0
  %2015 = vmatpush1.msra.mxu0 0.0
  %2016 = vmatprep.subr.mxu0 0.0
  %2017 = vmatpush1.msra.mxu0 0.0
  %2018 = vmatprep.subr.mxu0 0.0
  %2019 = vmatpush1.msra.mxu0 0.0
  %2020 = vmatprep.subr.mxu0 0.0
  %2021 = vmatpush1.msra.mxu0 0.0
  %2022 = vmatprep.subr.mxu0 0.0
  %2023 = vmatpush1.msra.mxu0 0.0
  %2024 = vmatprep.subr.mxu0 0.0
  %2025 = vmatpush1.msra.mxu0 0.0
  %2026 = vmatprep.subr.mxu0 0.0
  %2027 = vmatpush1.msra.mxu0 0.0
  %2028 = vmatprep.subr.mxu0 0.0
  %2029 = vmatpush1.msra.mxu0 0.0
  %2030 = vmatprep.subr.mxu0 0.0
  %2031 = vmatpush1.msra.mxu0 0.0
  %2032 = vmatprep.subr.mxu0 0.0
  %2033 = vmatpush1.msra.mxu0 0.0
  %2034 = vmatprep.subr.mxu0 0.0
  %2035 = vmatpush1.msra.mxu0 0.0
  %2036 = vmatprep.subr.mxu0 0.0
  %2037 = vmatpush1.msra.mxu0 0.0
  %2038 = vmatprep.subr.mxu0 0.0
  %2039 = vmatpush1.msra.mxu0 0.0
  %2040 = vmatprep.mubr.f32.mxu0 0.0
  %2041 = vmatmul.mubr.f32.gmra.mrb[0].mxu0 %v1959
  %v2042 = vpop.f32.mrb[0].mxu0
  %v2043 = vadd.f32 0.0, %v2042
  %v2044 = vpop.f32.mrb[0].mxu0
  %2045 = vdwg.mxu0
  %v2046 = vadd.f32 %v1940, %v2043
  %v2047 = vmul.f32 %v2046, 0.5
  %v2048 = vmul.f32 %v2047, %v2047
  %v2049 = vsel %vm1952, %v2048, 0.0
  %2050 = vadd.xlane.f32.xlu0 %v2049
  %v2051 = vpop.xlane.xlu0 %2050
  %v2052 = vsel %vm1952, %v2051, 0.0
  %v2053 = vrot.slane %v2052, 4
  %v2054 = vadd.f32 %v2052, %v2053
  %v2055 = vrot.slane %v2054, 2
  %v2056 = vadd.f32 %v2054, %v2055
  %v2057 = vrot.slane %v2056, 1
  %v2058 = vadd.f32 %v2056, %v2057
  %v2059 = vmax.f32 %v2058, 1e-24
  %v2060 = vrsqrt.pop %v2059
  %v2061 = vld [vmem:[%s4 + $0x80] sm:$0xf]
  %v2062 = vmul.f32 %v2047, %v2060
  %v2063 = vadd.f32 %v2062, %v2061
  %vm2064 = vcmask 1047556
  %v2065 = vsel %vm2064, %v2048, 0.0
  %2066 = vadd.xlane.f32.xlu0 %v2065
  %v2067 = vpop.xlane.xlu0 %2066
  %v2069 = vrot.slane %v2067, 4
  %v2071 = vsel %vm1952, %v2069, 0.0
  %v2072 = vrot.slane %v2071, 4
  %v2073 = vadd.f32 %v2071, %v2072
  %v2074 = vrot.slane %v2073, 2
  %v2075 = vadd.f32 %v2073, %v2074
  %v2076 = vrot.slane %v2075, 1
  %v2077 = vadd.f32 %v2075, %v2076
  %v2078 = vmax.f32 %v2077, 1e-24
  %v2079 = vrsqrt.pop %v2078
  %v2080 = vld [vmem:[%s4 + $0x84] sm:$0xf]
  %v2081 = vmul.f32 %v2047, %v2079
  %v2083 = vrot.slane %v2080, 4
  %v2085 = vadd.f32 %v2081, %v2083
  %v2086 = vsel %vm1952, %v2063, %v2085
  %2087 = vst [vmem:[%s5] sm:$0xff] %v2086
  // Predicated region
  $region22: #{_lambda_.1} parent=0 // pred_check
    _
  $region23: #{_lambda_.1} parent=0 // pred_check_branch
    %2089 = sbr.rel (0) target = $region25
  $region24: #{_lambda_.1} parent=0 // pred_region
    _
  $region25: #{_lambda_.1} parent=0 // pred_fallthru
    _
  // Predicated region
  $region26: #{_lambda_.1} parent=0 // pred_check
    _
  $region27: #{_lambda_.1} parent=0 // pred_check_branch
    %2091 = sbr.rel (0) target = $region29
  $region28: #{_lambda_.1} parent=0 // pred_region
    _
  $region29: #{_lambda_.1} parent=0 // pred_fallthru
    _

</llo_original>
